<compile_context>
chip_gen: v6e
topology: v6e:2x2x1
jax: 0.10.0
libtpu: 0.0.40
codegen_flags: <defaults>
</compile_context>

<pallas_src>
import functools

import jax
import jax.numpy as jnp
from jax import lax
from jax.experimental import pallas as pl
from jax.experimental.pallas import tpu as pltpu


_VMEM_LIMIT = 32 * 1024 * 1024     # explicit, portable scoped-VMEM ceiling
_WEIGHT_BUDGET = 6 * 1024 * 1024   # bf16 weight block kept resident / streamed
_ATTN_BUDGET = 20 * 1024 * 1024    # attention tiles + scratch per grid step


# ----------------------------------------------------------------------------
# tiling helpers
# ----------------------------------------------------------------------------
def _row_tile(n, d, max_tile=512):
    """Multiple-of-8 row tile that divides n, keeps the f32 (tile, d) block in
    budget and leaves >= 2 grid steps when possible (v7x has 2 TensorCores)."""
    cap = min(max_tile, max(8, (_WEIGHT_BUDGET // (4 * d)) // 8 * 8))
    if n >= 16:
        cap = min(cap, n // 2)
    t = min(cap, n) // 8 * 8
    while t >= 8:
        if n % t == 0:
            return t
        t -= 8
    # Awkward n: fall back to a single full block (block dim == array dim is
    # always legal); documented limitation rather than a silent OOB tile.
    return n


def _col_tile(n_out, d_in, budget=_WEIGHT_BUDGET):
    """Output-column tile for an (n_out, d_in) bf16 weight: keep it fully
    resident if it fits the budget, otherwise stream multiple-of-128 blocks."""
    if n_out * d_in * 2 <= budget or n_out % 128 != 0:
        return n_out
    cap = max(128, min(n_out // 2, budget // (2 * d_in)))
    t = cap // 128 * 128
    while t >= 128:
        if n_out % t == 0:
            return t
        t -= 128
    return n_out


def _seq_tile(s, max_tile=512):
    """Multiple-of-8 sequence tile that divides s (or s itself)."""
    if s <= max_tile:
        return s
    t = (max_tile // 8) * 8
    while t >= 8:
        if s % t == 0:
            return t
        t -= 8
    return s


def _attn_group_tile(g, tq, tkv, dh, budget=_ATTN_BUDGET):
    """(batch*head) groups per attention grid step.

    Counts double-buffered bf16 Q/K/V/O tiles, the padded f32 accumulator
    scratch AND the live f32 score/prob temporaries (the previous formula
    under-counted these), then caps at g//2 so both v7x TensorCores get work.
    """
    dh_pad = max(dh, 128)          # f32 scratch pads the lane dim to 128
    per_group = (
        2 * 2 * tq * dh            # Q tile, bf16, double-buffered
        + 2 * 2 * 2 * tkv * dh     # K and V tiles, bf16, double-buffered
        + 2 * 2 * tq * dh          # O tile, bf16, double-buffered
        + 4 * tq * dh_pad          # f32 accumulator scratch
        + 4 * 4 * tq * tkv         # live f32 scores / probs / exp temporaries
    )
    gb = int(max(1, min(g, budget // max(per_group, 1))))
    if g >= 2:
        gb = min(gb, g // 2)       # >= 2 grid steps for the v7x megacore
    while g % gb:
        gb -= 1
    return gb


def _const_spec(shape, index_map):
    """Grid-invariant operand: request single buffering (no double-buffer)."""
    if hasattr(pl, "Buffered"):
        try:
            return pl.BlockSpec(shape, index_map, pipeline_mode=pl.Buffered(1))
        except TypeError:
            pass
    return pl.BlockSpec(shape, index_map)


# ----------------------------------------------------------------------------
# Kernel 1: fused Q/K/V projection.
#   x tile (tm, D) f32 (cast to bf16 in-kernel); fused weight block (tn, D)
#   bf16 in torch (out,in) layout; bias f32; one MXU matmul with f32 acc ->
#   single contiguous lane-dense (tm, tn) bf16 store (no lane slices).
# ----------------------------------------------------------------------------
def _qkv_proj_kernel(x_ref, w_ref, b_ref, y_ref):
    xb = x_ref[...].astype(jnp.bfloat16)
    y = lax.dot_general(
        xb, w_ref[...],
        (((1,), (1,)), ((), ())),             # x @ W^T without materializing W^T
        preferred_element_type=jnp.float32,
    )
    y_ref[...] = (y + b_ref[...]).astype(y_ref.dtype)


# ----------------------------------------------------------------------------
# Kernel 2: flash-style scaled-dot-product attention (online softmax).
#   Q/K/V bf16 tiles; scale pre-folded into Q; running max/sum + f32
#   accumulator in VMEM scratch; finalize on the last KV step.
# ----------------------------------------------------------------------------
def _flash_attn_kernel(q_ref, k_ref, v_ref, o_ref, m_sc, l_sc, acc_sc):
    kv = pl.program_id(2)

    @pl.when(kv == 0)
    def _():
        m_sc[...] = jnp.full(m_sc.shape, -jnp.inf, m_sc.dtype)
        l_sc[...] = jnp.zeros(l_sc.shape, l_sc.dtype)
        acc_sc[...] = jnp.zeros(acc_sc.shape, acc_sc.dtype)

    s = lax.dot_general(                       # (gb, tq, tkv), bf16 MXU, f32 acc
        q_ref[...], k_ref[...],
        (((2,), (2,)), ((0,), (0,))),
        preferred_element_type=jnp.float32,
    )
    m_prev = m_sc[...]
    m_new = jnp.maximum(m_prev, jnp.max(s, axis=-1))          # (gb, tq) f32
    alpha = jnp.exp(m_prev - m_new)
    p = jnp.exp(s - m_new[..., None])                         # f32 probs
    l_sc[...] = alpha * l_sc[...] + jnp.sum(p, axis=-1)
    pv = lax.dot_general(                      # (gb, tq, Dh), bf16 MXU, f32 acc
        p.astype(v_ref.dtype), v_ref[...],
        (((2,), (1,)), ((0,), (0,))),
        preferred_element_type=jnp.float32,
    )
    acc_sc[...] = alpha[..., None] * acc_sc[...] + pv
    m_sc[...] = m_new

    @pl.when(kv == pl.num_programs(2) - 1)
    def _():
        denom = l_sc[...]
        inv = pl.reciprocal(denom, approx=True)               # EUP slot
        inv = inv * (2.0 - denom * inv)                       # Newton step, f32
        # TODO(synk): for Dh < 128 this store is lane-masked; pack heads into a
        #             (rows, D) lane-dense slab once Mosaic relayout cost is paid.
        o_ref[...] = (acc_sc[...] * inv[..., None]).astype(o_ref.dtype)


# ----------------------------------------------------------------------------
# Kernel 3: output projection + residual + LayerNorm (eps = 1e-5), row-tiled.
#   ctx bf16 @ Wo bf16 (MXU, f32 acc); residual / LN stats in f32.
# ----------------------------------------------------------------------------
def _out_ln_kernel(ctx_ref, w_ref, b_ref, x_ref, gamma_ref, beta_ref, o_ref):
    y = lax.dot_general(
        ctx_ref[...], w_ref[...],
        (((1,), (1,)), ((), ())),                             # ctx @ Wo^T
        preferred_element_type=jnp.float32,
    )
    y = y + b_ref[...] + x_ref[...]                           # bias + residual
    mean = jnp.mean(y, axis=-1, keepdims=True)
    var = jnp.mean(jnp.square(y - mean), axis=-1, keepdims=True)
    y_hat = (y - mean) * lax.rsqrt(var + 1e-5)
    o_ref[...] = y_hat * gamma_ref[...] + beta_ref[...]


# ----------------------------------------------------------------------------
# Wrapper
# ----------------------------------------------------------------------------
def multi_head_attention(x, params, num_head):
    """Forward pass of MultiHeadAttention (mask=None, dropout p=0)."""
    B, S, D = x.shape
    assert D % num_head == 0
    dh = D // num_head
    G = B * num_head
    N = B * S
    d3 = 3 * D

    x2d = x.reshape(N, D)
    tm = _row_tile(N, D)
    grid_rows = N // tm

    # --- fused Q/K/V projection (bf16 MXU, f32 acc, bf16 intermediate) ---
    tn = _col_tile(d3, D)
    n_col = d3 // tn
    if n_col == 1:
        w_spec = _const_spec((tn, D), lambda i, j: (0, 0))
        b_spec = _const_spec((1, tn), lambda i, j: (0, 0))
    else:
        w_spec = pl.BlockSpec((tn, D), lambda i, j: (j, 0))
        b_spec = pl.BlockSpec((1, tn), lambda i, j: (0, j))

    qkv_cost = pl.CostEstimate(
        flops=2 * N * D * d3,
        transcendentals=0,
        bytes_accessed=4 * N * D + 2 * d3 * D * (grid_rows if n_col > 1 else 1)
        + 4 * d3 + 2 * N * d3,
    )
    qkv2d = pl.pallas_call(
        _qkv_proj_kernel,
        out_shape=jax.ShapeDtypeStruct((N, d3), jnp.bfloat16),
        grid_spec=pltpu.PrefetchScalarGridSpec(
            num_scalar_prefetch=0,
            grid=(grid_rows, n_col),
            in_specs=[
                pl.BlockSpec((tm, D), lambda i, j: (i, 0)),   # x rows (pipelined)
                w_spec,                                       # fused W (bf16)
                b_spec,                                       # fused bias (f32)
            ],
            out_specs=pl.BlockSpec((tm, tn), lambda i, j: (i, j)),
        ),
        compiler_params=pltpu.CompilerParams(
            dimension_semantics=("parallel", "parallel"),
            vmem_limit_bytes=_VMEM_LIMIT),
        cost_estimate=qkv_cost,
    )(x2d, params["w_qkv"], params["b_qkv"][None, :])

    # Exact torch .view semantics: flat row-major reshape (B,S,D) -> (B*H, S, Dh)
    q = qkv2d[:, :D].reshape(G, S, dh)
    k = qkv2d[:, D:2 * D].reshape(G, S, dh)
    v = qkv2d[:, 2 * D:].reshape(G, S, dh)

    # --- flash attention: (group, q-tile, kv-tile) grid, online softmax ---
    tq = _seq_tile(S)
    tkv = _seq_tile(S)
    gb = _attn_group_tile(G, tq, tkv, dh)
    attn_cost = pl.CostEstimate(
        flops=4 * G * S * S * dh,
        transcendentals=G * S * S,
        bytes_accessed=2 * (2 * G * S * dh + 2 * (S // tq) * G * S * dh),
    )
    context = pl.pallas_call(
        _flash_attn_kernel,
        out_shape=jax.ShapeDtypeStruct((G, S, dh), jnp.bfloat16),
        grid_spec=pltpu.PrefetchScalarGridSpec(
            num_scalar_prefetch=0,
            grid=(G // gb, S // tq, S // tkv),
            in_specs=[
                pl.BlockSpec((gb, tq, dh), lambda g, qi, kv: (g, qi, 0)),
                pl.BlockSpec((gb, tkv, dh), lambda g, qi, kv: (g, kv, 0)),
                pl.BlockSpec((gb, tkv, dh), lambda g, qi, kv: (g, kv, 0)),
            ],
            out_specs=pl.BlockSpec((gb, tq, dh), lambda g, qi, kv: (g, qi, 0)),
            scratch_shapes=[
                pltpu.VMEM((gb, tq), jnp.float32),        # running max
                pltpu.VMEM((gb, tq), jnp.float32),        # running sum
                pltpu.VMEM((gb, tq, dh), jnp.float32),    # f32 accumulator
            ],
        ),
        compiler_params=pltpu.CompilerParams(
            dimension_semantics=("parallel", "parallel", "arbitrary"),
            vmem_limit_bytes=_VMEM_LIMIT),
        cost_estimate=attn_cost,
    )(q, k, v)

    ctx2d = context.reshape(N, D)   # == context.view(B, -1, Dh*H) flattened

    # --- output projection + residual + layernorm ---
    out_cost = pl.CostEstimate(
        flops=2 * N * D * D + 10 * N * D,
        transcendentals=N,
        bytes_accessed=2 * N * D + 2 * D * D + 8 * N * D + 16 * D,
    )
    out2d = pl.pallas_call(
        _out_ln_kernel,
        out_shape=jax.ShapeDtypeStruct((N, D), jnp.float32),
        grid_spec=pltpu.PrefetchScalarGridSpec(
            num_scalar_prefetch=0,
            grid=(grid_rows,),
            in_specs=[
                pl.BlockSpec((tm, D), lambda i: (i, 0)),      # context rows (bf16)
                _const_spec((D, D), lambda i: (0, 0)),        # Wo (bf16, resident)
                _const_spec((1, D), lambda i: (0, 0)),        # bo (f32)
                pl.BlockSpec((tm, D), lambda i: (i, 0)),      # residual x rows (f32)
                _const_spec((1, D), lambda i: (0, 0)),        # gamma
                _const_spec((1, D), lambda i: (0, 0)),        # beta
            ],
            out_specs=pl.BlockSpec((tm, D), lambda i: (i, 0)),
        ),
        compiler_params=pltpu.CompilerParams(
            dimension_semantics=("parallel",),
            vmem_limit_bytes=_VMEM_LIMIT),
        cost_estimate=out_cost,
    )(ctx2d, params["wo_bf16"], params["bo"][None, :], x2d,
      params["gamma"][None, :], params["beta"][None, :])

    return out2d.reshape(B, S, D)


# ----------------------------------------------------------------------------
# Pure-JAX reference (mirrors the PyTorch forward) for a sanity check.
# ----------------------------------------------------------------------------
def reference_forward(x, params, num_head):
    B, S, D = x.shape
    dim_head = D // num_head
    q = x @ params["wq"].T + params["bq"]
    k = x @ params["wk"].T + params["bk"]
    v = x @ params["wv"].T + params["bv"]
    q = q.reshape(B * num_head, S, dim_head)
    k = k.reshape(B * num_head, S, dim_head)
    v = v.reshape(B * num_head, S, dim_head)
    scale = float(dim_head) ** (-0.5)
    att = jnp.einsum("gsd,gtd->gst", q, k) * scale
    att = jax.nn.softmax(att, axis=-1)
    ctx = jnp.einsum("gst,gtd->gsd", att, v).reshape(B, S, D)
    out = ctx @ params["wo"].T + params["bo"]
    out = out + x
    mean = out.mean(-1, keepdims=True)
    var = ((out - mean) ** 2).mean(-1, keepdims=True)
    return (out - mean) / jnp.sqrt(var + 1e-5) * params["gamma"] + params["beta"]


def init_params(key, dim_model, num_head):
    """Deterministic parameter init (torch-Linear-style uniform bounds)."""
    keys = jax.random.split(key, 8)
    bound = 1.0 / (dim_model ** 0.5)

    def lin(kw, kb):
        w = jax.random.uniform(kw, (dim_model, dim_model), jnp.float32, -bound, bound)
        b = jax.random.uniform(kb, (dim_model,), jnp.float32, -bound, bound)
        return w, b

    wq, bq = lin(keys[0], keys[1])
    wk, bk = lin(keys[2], keys[3])
    wv, bv = lin(keys[4], keys[5])
    wo, bo = lin(keys[6], keys[7])

    dim_head = dim_model // num_head
    scale = float(dim_head) ** (-0.5)
    # 1/sqrt(Dh) softmax scale folded into the Q projection at init time
    # (one-time param transform; kernel never multiplies by scale).
    w_qkv = jnp.concatenate([wq * scale, wk, wv], axis=0)     # (3D, D), torch (out,in)
    b_qkv = jnp.concatenate([bq * scale, bk, bv], axis=0)     # (3D,)

    return dict(
        wq=wq, bq=bq, wk=wk, bk=bk, wv=wv, bv=bv, wo=wo, bo=bo,
        w_qkv=w_qkv.astype(jnp.bfloat16),     # bf16 MXU operand (half VMEM/HBM)
        b_qkv=b_qkv,                          # bias kept f32 (added post-acc)
        wo_bf16=wo.astype(jnp.bfloat16),
        gamma=jnp.ones((dim_model,), jnp.float32),
        beta=jnp.zeros((dim_model,), jnp.float32),
    )


if __name__ == "__main__":
    B, S, dim_model, num_head = 2, 8, 32, 4

    key = jax.random.PRNGKey(0)
    kx, kp = jax.random.split(key)
    x = jax.random.normal(kx, (B, S, dim_model), jnp.float32)
    params = init_params(kp, dim_model, num_head)

    fwd = jax.jit(functools.partial(multi_head_attention, num_head=num_head))
    out = jax.block_until_ready(fwd(x, params))

    ref = reference_forward(x, params, num_head)
    assert out.shape == (B, S, dim_model)
    max_err = float(jnp.max(jnp.abs(out - ref)))
    # bf16 MXU inputs with f32 accumulation -> slightly looser tolerance
    assert max_err < 5e-2, f"mismatch vs reference: {max_err}"

    print("KERNEL_OK")
</pallas_src>

<mosaic_0001>
module attributes {stable_mosaic.version = 11 : i64} {
  func.func @_qkv_proj_kernel(%arg0: i32, %arg1: i32, %arg2: memref<8x32xf32, #tpu.memory_space<vmem>>, %arg3: memref<96x32xbf16, #tpu.memory_space<vmem>>, %arg4: memref<1x96xf32, #tpu.memory_space<vmem>>, %arg5: memref<8x96xbf16, #tpu.memory_space<vmem>>) attributes {dimension_semantics = [#tpu.dimension_semantics<parallel>, #tpu.dimension_semantics<parallel>], iteration_bounds = array<i64: 2, 1>, scalar_prefetch = 0 : i64, scratch_operands = 0 : i64, tpu.core_type = #tpu.core_type<tc>, window_params = [{transform_indices = @transform_0, window_bounds = array<i64: 8, 32>}, {pipeline_mode = #tpu.pipeline_mode<synchronous>, transform_indices = @transform_1, window_bounds = array<i64: 96, 32>}, {pipeline_mode = #tpu.pipeline_mode<synchronous>, transform_indices = @transform_2, window_bounds = array<i64: 1, 96>}, {transform_indices = @transform_3, window_bounds = array<i64: 8, 96>}]} {
    %c0 = arith.constant 0 : index
    %c0_0 = arith.constant 0 : index
    %0 = vector.load %arg2[%c0, %c0_0] : memref<8x32xf32, #tpu.memory_space<vmem>>, vector<8x32xf32>
    %1 = arith.truncf %0 : vector<8x32xf32> to vector<8x32xbf16>
    %c0_1 = arith.constant 0 : index
    %c0_2 = arith.constant 0 : index
    %2 = vector.load %arg3[%c0_1, %c0_2] : memref<96x32xbf16, #tpu.memory_space<vmem>>, vector<96x32xbf16>
    %cst = arith.constant dense<0.000000e+00> : vector<8x96xf32>
    %3 = tpu.matmul %1, %2, %cst {dimension_numbers = #tpu.dot_dimension_numbers<[1], [1], [0], [0], [0, 0, 1, 0], [], []>} : vector<8x32xbf16>, vector<96x32xbf16>, vector<8x96xf32> -> vector<8x96xf32>
    %c0_3 = arith.constant 0 : index
    %c0_4 = arith.constant 0 : index
    %4 = vector.load %arg4[%c0_3, %c0_4] : memref<1x96xf32, #tpu.memory_space<vmem>>, vector<1x96xf32>
    %5 = vector.broadcast %4 : vector<1x96xf32> to vector<8x96xf32>
    %6 = arith.addf %3, %5 : vector<8x96xf32>
    %7 = arith.truncf %6 : vector<8x96xf32> to vector<8x96xbf16>
    %c0_5 = arith.constant 0 : index
    %c0_6 = arith.constant 0 : index
    %8 = vector.load %arg5[%c0_5, %c0_6] : memref<8x96xbf16, #tpu.memory_space<vmem>>, vector<8x96xbf16>
    tpu.vector_store %arg5[%c0_5, %c0_6], %7 {strides = array<i32>} : memref<8x96xbf16, #tpu.memory_space<vmem>>, vector<8x96xbf16>,
    return
  }
  func.func @transform_0(%arg0: i32, %arg1: i32) -> (i32, i32) {
    %c0_i32 = arith.constant 0 : i32
    %c0_i32_0 = arith.constant 0 : i32
    return %arg0, %c0_i32 : i32, i32
  }
  func.func @transform_1(%arg0: i32, %arg1: i32) -> (i32, i32) {
    %c0_i32 = arith.constant 0 : i32
    %c0_i32_0 = arith.constant 0 : i32
    %c0_i32_1 = arith.constant 0 : i32
    return %c0_i32, %c0_i32_0 : i32, i32
  }
  func.func @transform_2(%arg0: i32, %arg1: i32) -> (i32, i32) {
    %c0_i32 = arith.constant 0 : i32
    %c0_i32_0 = arith.constant 0 : i32
    %c0_i32_1 = arith.constant 0 : i32
    return %c0_i32, %c0_i32_0 : i32, i32
  }
  func.func @transform_3(%arg0: i32, %arg1: i32) -> (i32, i32) {
    %c0_i32 = arith.constant 0 : i32
    return %arg0, %arg1 : i32, i32
  }
}

module attributes {stable_mosaic.version = 11 : i64} {
  func.func @_flash_attn_kernel(%arg0: i32, %arg1: i32, %arg2: i32, %arg3: memref<4x8x8xbf16, #tpu.memory_space<vmem>>, %arg4: memref<4x8x8xbf16, #tpu.memory_space<vmem>>, %arg5: memref<4x8x8xbf16, #tpu.memory_space<vmem>>, %arg6: memref<4x8x8xbf16, #tpu.memory_space<vmem>>, %arg7: memref<4x8xf32, #tpu.memory_space<vmem>>, %arg8: memref<4x8xf32, #tpu.memory_space<vmem>>, %arg9: memref<4x8x8xf32, #tpu.memory_space<vmem>>) attributes {dimension_semantics = [#tpu.dimension_semantics<parallel>, #tpu.dimension_semantics<parallel>, #tpu.dimension_semantics<arbitrary>], iteration_bounds = array<i64: 2, 1, 1>, scalar_prefetch = 0 : i64, scratch_operands = 3 : i64, tpu.core_type = #tpu.core_type<tc>, window_params = [{transform_indices = @transform_0, window_bounds = array<i64: 4, 8, 8>}, {transform_indices = @transform_1, window_bounds = array<i64: 4, 8, 8>}, {transform_indices = @transform_2, window_bounds = array<i64: 4, 8, 8>}, {transform_indices = @transform_3, window_bounds = array<i64: 4, 8, 8>}]} {
    %c0_i32 = arith.constant 0 : i32
    %0 = arith.cmpi eq, %arg2, %c0_i32 : i32
    %1 = arith.extui %0 : i1 to i32
    %c0_i32_0 = arith.constant 0 : i32
    %2 = arith.cmpi ne, %1, %c0_i32_0 : i32
    scf.if %2 {
      %cst_28 = arith.constant 0xFF800000 : f32
      %33 = vector.broadcast %cst_28 : f32 to vector<4x8xf32>
      %c0_29 = arith.constant 0 : index
      %c0_30 = arith.constant 0 : index
      %34 = vector.load %arg7[%c0_29, %c0_30] : memref<4x8xf32, #tpu.memory_space<vmem>>, vector<4x8xf32>
      tpu.vector_store %arg7[%c0_29, %c0_30], %33 {strides = array<i32>} : memref<4x8xf32, #tpu.memory_space<vmem>>, vector<4x8xf32>,
      %cst_31 = arith.constant 0.000000e+00 : f32
      %35 = vector.broadcast %cst_31 : f32 to vector<4x8xf32>
      %c0_32 = arith.constant 0 : index
      %c0_33 = arith.constant 0 : index
      %36 = vector.load %arg8[%c0_32, %c0_33] : memref<4x8xf32, #tpu.memory_space<vmem>>, vector<4x8xf32>
      tpu.vector_store %arg8[%c0_32, %c0_33], %35 {strides = array<i32>} : memref<4x8xf32, #tpu.memory_space<vmem>>, vector<4x8xf32>,
      %cst_34 = arith.constant 0.000000e+00 : f32
      %37 = vector.broadcast %cst_34 : f32 to vector<4x8x8xf32>
      %c0_35 = arith.constant 0 : index
      %c0_36 = arith.constant 0 : index
      %c0_37 = arith.constant 0 : index
      %38 = vector.load %arg9[%c0_35, %c0_36, %c0_37] : memref<4x8x8xf32, #tpu.memory_space<vmem>>, vector<4x8x8xf32>
      tpu.vector_store %arg9[%c0_35, %c0_36, %c0_37], %37 {strides = array<i32>} : memref<4x8x8xf32, #tpu.memory_space<vmem>>, vector<4x8x8xf32>,
    } else {
    }
    %c0 = arith.constant 0 : index
    %c0_1 = arith.constant 0 : index
    %c0_2 = arith.constant 0 : index
    %3 = vector.load %arg3[%c0, %c0_1, %c0_2] : memref<4x8x8xbf16, #tpu.memory_space<vmem>>, vector<4x8x8xbf16>
    %c0_3 = arith.constant 0 : index
    %c0_4 = arith.constant 0 : index
    %c0_5 = arith.constant 0 : index
    %4 = vector.load %arg4[%c0_3, %c0_4, %c0_5] : memref<4x8x8xbf16, #tpu.memory_space<vmem>>, vector<4x8x8xbf16>
    %cst = arith.constant dense<0.000000e+00> : vector<4x8x8xf32>
    %5 = tpu.matmul %3, %4, %cst {dimension_numbers = #tpu.dot_dimension_numbers<[2], [2], [1], [1], [0, 0, 0, 1, 1, 1], [0], [0]>} : vector<4x8x8xbf16>, vector<4x8x8xbf16>, vector<4x8x8xf32> -> vector<4x8x8xf32>
    %c0_6 = arith.constant 0 : index
    %c0_7 = arith.constant 0 : index
    %6 = vector.load %arg7[%c0_6, %c0_7] : memref<4x8xf32, #tpu.memory_space<vmem>>, vector<4x8xf32>
    %cst_8 = arith.constant dense<0xFF800000> : vector<4x8xf32>
    %7 = vector.multi_reduction <maximumf>, %5, %cst_8 [2] : vector<4x8x8xf32> to vector<4x8xf32>
    %8 = arith.maximumf %6, %7 : vector<4x8xf32>
    %9 = arith.subf %6, %8 : vector<4x8xf32>
    %10 = math.exp %9 : vector<4x8xf32>
    %11 = vector.shape_cast %8 : vector<4x8xf32> to vector<4x8x1xf32>
    %12 = vector.broadcast %11 : vector<4x8x1xf32> to vector<4x8x8xf32>
    %13 = arith.subf %5, %12 : vector<4x8x8xf32>
    %14 = math.exp %13 : vector<4x8x8xf32>
    %c0_9 = arith.constant 0 : index
    %c0_10 = arith.constant 0 : index
    %15 = vector.load %arg8[%c0_9, %c0_10] : memref<4x8xf32, #tpu.memory_space<vmem>>, vector<4x8xf32>
    %16 = arith.mulf %10, %15 : vector<4x8xf32>
    %cst_11 = arith.constant dense<0.000000e+00> : vector<4x8xf32>
    %17 = vector.multi_reduction <add>, %14, %cst_11 [2] : vector<4x8x8xf32> to vector<4x8xf32>
    %18 = arith.addf %16, %17 : vector<4x8xf32>
    %c0_12 = arith.constant 0 : index
    %c0_13 = arith.constant 0 : index
    %19 = vector.load %arg8[%c0_12, %c0_13] : memref<4x8xf32, #tpu.memory_space<vmem>>, vector<4x8xf32>
    tpu.vector_store %arg8[%c0_12, %c0_13], %18 {strides = array<i32>} : memref<4x8xf32, #tpu.memory_space<vmem>>, vector<4x8xf32>,
    %20 = arith.truncf %14 : vector<4x8x8xf32> to vector<4x8x8xbf16>
    %c0_14 = arith.constant 0 : index
    %c0_15 = arith.constant 0 : index
    %c0_16 = arith.constant 0 : index
    %21 = vector.load %arg5[%c0_14, %c0_15, %c0_16] : memref<4x8x8xbf16, #tpu.memory_space<vmem>>, vector<4x8x8xbf16>
    %cst_17 = arith.constant dense<0.000000e+00> : vector<4x8x8xf32>
    %22 = tpu.matmul %20, %21, %cst_17 {dimension_numbers = #tpu.dot_dimension_numbers<[2], [1], [1], [2], [0, 0, 0, 1, 1, 2], [0], [0]>} : vector<4x8x8xbf16>, vector<4x8x8xbf16>, vector<4x8x8xf32> -> vector<4x8x8xf32>
    %23 = vector.shape_cast %10 : vector<4x8xf32> to vector<4x8x1xf32>
    %c0_18 = arith.constant 0 : index
    %c0_19 = arith.constant 0 : index
    %c0_20 = arith.constant 0 : index
    %24 = vector.load %arg9[%c0_18, %c0_19, %c0_20] : memref<4x8x8xf32, #tpu.memory_space<vmem>>, vector<4x8x8xf32>
    %25 = vector.broadcast %23 : vector<4x8x1xf32> to vector<4x8x8xf32>
    %26 = arith.mulf %25, %24 : vector<4x8x8xf32>
    %27 = arith.addf %26, %22 : vector<4x8x8xf32>
    %c0_21 = arith.constant 0 : index
    %c0_22 = arith.constant 0 : index
    %c0_23 = arith.constant 0 : index
    %28 = vector.load %arg9[%c0_21, %c0_22, %c0_23] : memref<4x8x8xf32, #tpu.memory_space<vmem>>, vector<4x8x8xf32>
    tpu.vector_store %arg9[%c0_21, %c0_22, %c0_23], %27 {strides = array<i32>} : memref<4x8x8xf32, #tpu.memory_space<vmem>>, vector<4x8x8xf32>,
    %c0_24 = arith.constant 0 : index
    %c0_25 = arith.constant 0 : index
    %29 = vector.load %arg7[%c0_24, %c0_25] : memref<4x8xf32, #tpu.memory_space<vmem>>, vector<4x8xf32>
    tpu.vector_store %arg7[%c0_24, %c0_25], %8 {strides = array<i32>} : memref<4x8xf32, #tpu.memory_space<vmem>>, vector<4x8xf32>,
    %c0_i32_26 = arith.constant 0 : i32
    %30 = arith.cmpi eq, %arg2, %c0_i32_26 : i32
    %31 = arith.extui %30 : i1 to i32
    %c0_i32_27 = arith.constant 0 : i32
    %32 = arith.cmpi ne, %31, %c0_i32_27 : i32
    scf.if %32 {
      %c0_28 = arith.constant 0 : index
      %c0_29 = arith.constant 0 : index
      %33 = vector.load %arg8[%c0_28, %c0_29] : memref<4x8xf32, #tpu.memory_space<vmem>>, vector<4x8xf32>
      %34 = tpu.reciprocal %33 {approx = true} : vector<4x8xf32> -> vector<4x8xf32>
      %35 = arith.mulf %33, %34 : vector<4x8xf32>
      %cst_30 = arith.constant 2.000000e+00 : f32
      %36 = vector.broadcast %cst_30 : f32 to vector<4x8xf32>
      %37 = arith.subf %36, %35 : vector<4x8xf32>
      %38 = arith.mulf %34, %37 : vector<4x8xf32>
      %c0_31 = arith.constant 0 : index
      %c0_32 = arith.constant 0 : index
      %c0_33 = arith.constant 0 : index
      %39 = vector.load %arg9[%c0_31, %c0_32, %c0_33] : memref<4x8x8xf32, #tpu.memory_space<vmem>>, vector<4x8x8xf32>
      %40 = vector.shape_cast %38 : vector<4x8xf32> to vector<4x8x1xf32>
      %41 = vector.broadcast %40 : vector<4x8x1xf32> to vector<4x8x8xf32>
      %42 = arith.mulf %39, %41 : vector<4x8x8xf32>
      %43 = arith.truncf %42 : vector<4x8x8xf32> to vector<4x8x8xbf16>
      %c0_34 = arith.constant 0 : index
      %c0_35 = arith.constant 0 : index
      %c0_36 = arith.constant 0 : index
      %44 = vector.load %arg6[%c0_34, %c0_35, %c0_36] : memref<4x8x8xbf16, #tpu.memory_space<vmem>>, vector<4x8x8xbf16>
      tpu.vector_store %arg6[%c0_34, %c0_35, %c0_36], %43 {strides = array<i32>} : memref<4x8x8xbf16, #tpu.memory_space<vmem>>, vector<4x8x8xbf16>,
    } else {
    }
    return
  }
  func.func @transform_0(%arg0: i32, %arg1: i32, %arg2: i32) -> (i32, i32, i32) {
    %c0_i32 = arith.constant 0 : i32
    %c0_i32_0 = arith.constant 0 : i32
    return %arg0, %arg1, %c0_i32 : i32, i32, i32
  }
  func.func @transform_1(%arg0: i32, %arg1: i32, %arg2: i32) -> (i32, i32, i32) {
    %c0_i32 = arith.constant 0 : i32
    %c0_i32_0 = arith.constant 0 : i32
    return %arg0, %arg2, %c0_i32 : i32, i32, i32
  }
  func.func @transform_2(%arg0: i32, %arg1: i32, %arg2: i32) -> (i32, i32, i32) {
    %c0_i32 = arith.constant 0 : i32
    %c0_i32_0 = arith.constant 0 : i32
    return %arg0, %arg2, %c0_i32 : i32, i32, i32
  }
  func.func @transform_3(%arg0: i32, %arg1: i32, %arg2: i32) -> (i32, i32, i32) {
    %c0_i32 = arith.constant 0 : i32
    %c0_i32_0 = arith.constant 0 : i32
    return %arg0, %arg1, %c0_i32 : i32, i32, i32
  }
}

module attributes {stable_mosaic.version = 11 : i64} {
  func.func @_out_ln_kernel(%arg0: i32, %arg1: memref<8x32xbf16, #tpu.memory_space<vmem>>, %arg2: memref<32x32xbf16, #tpu.memory_space<vmem>>, %arg3: memref<1x32xf32, #tpu.memory_space<vmem>>, %arg4: memref<8x32xf32, #tpu.memory_space<vmem>>, %arg5: memref<1x32xf32, #tpu.memory_space<vmem>>, %arg6: memref<1x32xf32, #tpu.memory_space<vmem>>, %arg7: memref<8x32xf32, #tpu.memory_space<vmem>>) attributes {dimension_semantics = [#tpu.dimension_semantics<parallel>], iteration_bounds = array<i64: 2>, scalar_prefetch = 0 : i64, scratch_operands = 0 : i64, tpu.core_type = #tpu.core_type<tc>, window_params = [{transform_indices = @transform_0, window_bounds = array<i64: 8, 32>}, {pipeline_mode = #tpu.pipeline_mode<synchronous>, transform_indices = @transform_1, window_bounds = array<i64: 32, 32>}, {pipeline_mode = #tpu.pipeline_mode<synchronous>, transform_indices = @transform_2, window_bounds = array<i64: 1, 32>}, {transform_indices = @transform_3, window_bounds = array<i64: 8, 32>}, {pipeline_mode = #tpu.pipeline_mode<synchronous>, transform_indices = @transform_4, window_bounds = array<i64: 1, 32>}, {pipeline_mode = #tpu.pipeline_mode<synchronous>, transform_indices = @transform_5, window_bounds = array<i64: 1, 32>}, {transform_indices = @transform_6, window_bounds = array<i64: 8, 32>}]} {
    %c0 = arith.constant 0 : index
    %c0_0 = arith.constant 0 : index
    %0 = vector.load %arg1[%c0, %c0_0] : memref<8x32xbf16, #tpu.memory_space<vmem>>, vector<8x32xbf16>
    %c0_1 = arith.constant 0 : index
    %c0_2 = arith.constant 0 : index
    %1 = vector.load %arg2[%c0_1, %c0_2] : memref<32x32xbf16, #tpu.memory_space<vmem>>, vector<32x32xbf16>
    %cst = arith.constant dense<0.000000e+00> : vector<8x32xf32>
    %2 = tpu.matmul %0, %1, %cst {dimension_numbers = #tpu.dot_dimension_numbers<[1], [1], [0], [0], [0, 0, 1, 0], [], []>} : vector<8x32xbf16>, vector<32x32xbf16>, vector<8x32xf32> -> vector<8x32xf32>
    %c0_3 = arith.constant 0 : index
    %c0_4 = arith.constant 0 : index
    %3 = vector.load %arg3[%c0_3, %c0_4] : memref<1x32xf32, #tpu.memory_space<vmem>>, vector<1x32xf32>
    %4 = vector.broadcast %3 : vector<1x32xf32> to vector<8x32xf32>
    %5 = arith.addf %2, %4 : vector<8x32xf32>
    %c0_5 = arith.constant 0 : index
    %c0_6 = arith.constant 0 : index
    %6 = vector.load %arg4[%c0_5, %c0_6] : memref<8x32xf32, #tpu.memory_space<vmem>>, vector<8x32xf32>
    %7 = arith.addf %5, %6 : vector<8x32xf32>
    %cst_7 = arith.constant dense<0.000000e+00> : vector<8xf32>
    %8 = vector.multi_reduction <add>, %7, %cst_7 [1] : vector<8x32xf32> to vector<8xf32>
    %9 = vector.shape_cast %8 : vector<8xf32> to vector<8x1xf32>
    %cst_8 = arith.constant 3.200000e+01 : f32
    %10 = vector.broadcast %cst_8 : f32 to vector<8x1xf32>
    %11 = arith.divf %9, %10 : vector<8x1xf32>
    %12 = vector.broadcast %11 : vector<8x1xf32> to vector<8x32xf32>
    %13 = arith.subf %7, %12 : vector<8x32xf32>
    %14 = arith.mulf %13, %13 : vector<8x32xf32>
    %cst_9 = arith.constant dense<0.000000e+00> : vector<8xf32>
    %15 = vector.multi_reduction <add>, %14, %cst_9 [1] : vector<8x32xf32> to vector<8xf32>
    %16 = vector.shape_cast %15 : vector<8xf32> to vector<8x1xf32>
    %cst_10 = arith.constant 3.200000e+01 : f32
    %17 = vector.broadcast %cst_10 : f32 to vector<8x1xf32>
    %18 = arith.divf %16, %17 : vector<8x1xf32>
    %19 = vector.broadcast %11 : vector<8x1xf32> to vector<8x32xf32>
    %20 = arith.subf %7, %19 : vector<8x32xf32>
    %cst_11 = arith.constant 9.99999974E-6 : f32
    %21 = vector.broadcast %cst_11 : f32 to vector<8x1xf32>
    %22 = arith.addf %18, %21 : vector<8x1xf32>
    %23 = math.rsqrt %22 : vector<8x1xf32>
    %24 = vector.broadcast %23 : vector<8x1xf32> to vector<8x32xf32>
    %25 = arith.mulf %20, %24 : vector<8x32xf32>
    %c0_12 = arith.constant 0 : index
    %c0_13 = arith.constant 0 : index
    %26 = vector.load %arg5[%c0_12, %c0_13] : memref<1x32xf32, #tpu.memory_space<vmem>>, vector<1x32xf32>
    %27 = vector.broadcast %26 : vector<1x32xf32> to vector<8x32xf32>
    %28 = arith.mulf %25, %27 : vector<8x32xf32>
    %c0_14 = arith.constant 0 : index
    %c0_15 = arith.constant 0 : index
    %29 = vector.load %arg6[%c0_14, %c0_15] : memref<1x32xf32, #tpu.memory_space<vmem>>, vector<1x32xf32>
    %30 = vector.broadcast %29 : vector<1x32xf32> to vector<8x32xf32>
    %31 = arith.addf %28, %30 : vector<8x32xf32>
    %c0_16 = arith.constant 0 : index
    %c0_17 = arith.constant 0 : index
    %32 = vector.load %arg7[%c0_16, %c0_17] : memref<8x32xf32, #tpu.memory_space<vmem>>, vector<8x32xf32>
    tpu.vector_store %arg7[%c0_16, %c0_17], %31 {strides = array<i32>} : memref<8x32xf32, #tpu.memory_space<vmem>>, vector<8x32xf32>,
    return
  }
  func.func @transform_0(%arg0: i32) -> (i32, i32) {
    %c0_i32 = arith.constant 0 : i32
    %c0_i32_0 = arith.constant 0 : i32
    return %arg0, %c0_i32 : i32, i32
  }
  func.func @transform_1(%arg0: i32) -> (i32, i32) {
    %c0_i32 = arith.constant 0 : i32
    %c0_i32_0 = arith.constant 0 : i32
    %c0_i32_1 = arith.constant 0 : i32
    return %c0_i32, %c0_i32_0 : i32, i32
  }
  func.func @transform_2(%arg0: i32) -> (i32, i32) {
    %c0_i32 = arith.constant 0 : i32
    %c0_i32_0 = arith.constant 0 : i32
    %c0_i32_1 = arith.constant 0 : i32
    return %c0_i32, %c0_i32_0 : i32, i32
  }
  func.func @transform_3(%arg0: i32) -> (i32, i32) {
    %c0_i32 = arith.constant 0 : i32
    %c0_i32_0 = arith.constant 0 : i32
    return %arg0, %c0_i32 : i32, i32
  }
  func.func @transform_4(%arg0: i32) -> (i32, i32) {
    %c0_i32 = arith.constant 0 : i32
    %c0_i32_0 = arith.constant 0 : i32
    %c0_i32_1 = arith.constant 0 : i32
    return %c0_i32, %c0_i32_0 : i32, i32
  }
  func.func @transform_5(%arg0: i32) -> (i32, i32) {
    %c0_i32 = arith.constant 0 : i32
    %c0_i32_0 = arith.constant 0 : i32
    %c0_i32_1 = arith.constant 0 : i32
    return %c0_i32, %c0_i32_0 : i32, i32
  }
  func.func @transform_6(%arg0: i32) -> (i32, i32) {
    %c0_i32 = arith.constant 0 : i32
    %c0_i32_0 = arith.constant 0 : i32
    return %arg0, %c0_i32 : i32, i32
  }
}

</mosaic_0001>

<llo_original>
// kernel: multi_head_attention.3
$region0: #{multi_head_attention.3}
  #allocation0 [shape = 'u32[]', space=smem, size = 0x4, offset = 0x4, fixed_abs, tag = 'smem constant byte address 0x4 - core index']
  #allocation1 [shape = 'u32[144,128]{1,0:T(1,128)}', space=vmem, size = 0x12000, scoped, tag = 'internal scratch']
  %s0 = inlined_call_operand.vmem [shape: f32[16,32], index: 0, kind: input, shape index: {}]
  %s1 = inlined_call_operand.vmem [shape: bf16[96,32], index: 1, kind: input, shape index: {}]
  %s2 = inlined_call_operand.vmem [shape: f32[1,96], index: 2, kind: input, shape index: {}]
  %s3 = inlined_call_operand.vmem [shape: bf16[16,96], index: 3, kind: output, shape index: {}]
  %s4 = sld [smem:[#allocation0]]
  $region45: #{multi_head_attention.3} parent=0
    _
  %s6 = ssub.s32 1, %s4
  %s7 = scalar_select 0, %s6, %s4
  loop: start=0, step=1, limit=4
  $region2: #{multi_head_attention.3} parent=0 // loop_pre_header
    _
  $region3: #{multi_head_attention.3} parent=0 // loop_header
    %s9 = sphi 0, %s13
    %p10 = scmp.ge.s32.totalorder %s9, 4
    %s16 = sphi 0, %s28
    %s17 = sphi 0, %s24
    %s18 = sphi 0, %s16
    %s19 = sphi 0, %s17
    %s20 = sphi 0, %s18
    %s21 = sphi 0, %s19
    %s31 = sphi 0, %s33
    %s34 = sphi 0, %s31
    %s35 = sphi 0, %s34
    %s51 = sphi 0, %s35
    %s55 = sphi 0, %s55
    %s57 = sphi 0, %s55
    %s58 = sphi 0, %s57
    %s72 = sphi 0, %s58
    %s76 = sphi 0, %s76
    %s78 = sphi 0, %s76
    %s79 = sphi 0, %s78
    %s93 = sphi 0, %s79
    %s101 = sphi 0, %s103
    %s104 = sphi 0, %s101
    %s105 = sphi 0, %s104
    %s121 = sphi 0, %s105
  $region4: #{multi_head_attention.3} parent=0 // loop_header_branch
    %12 = sbr.rel (%p10) target = $region8
  $region5: #{multi_head_attention.3} parent=0 // loop_body
    %s14 = ssub.s32 %s9, 1
    %s15 = ssub.s32 %s9, 2
    %s22 = sadd.s32 1, %s17
    %p23 = scmp.ge.s32.totalorder %s22, 1
    %s24 = scalar_select %p23, 0, %s22
    %s25 = sadd.s32 1, %s16
    %s26 = scalar_select %p23, %s25, %s16
    %p27 = scmp.ge.s32.totalorder %s26, 2
    %s28 = scalar_select %p27, 0, %s26
    %s29 = ssub.s32 %s16, %s28
    %p30 = scmp.eq.s32.totalorder %s29, 0
    %s32 = sadd.s32 %s31, 1
    %s33 = scalar_select %p30, %s31, %s32
    %p36 = pneg %p30
    %p37 = scmp.eq.s32.totalorder %s9, 1
    %p38 = por %p36, %p37
    %p39 = scmp.ne.s32.totalorder %s31, %s34
    %p40 = scmp.eq.s32.totalorder %s9, 0
    %p41 = por %p39, %p40
    %p42 = scmp.ne.s32.totalorder %s31, %s34
    %p43 = scmp.eq.s32.totalorder %s14, 1
    %p44 = por %p42, %p43
    %p45 = scmp.ne.s32.totalorder %s34, %s35
    %p46 = scmp.eq.s32.totalorder %s14, 0
    %p47 = por %p45, %p46
    %p48 = scmp.ne.s32.totalorder %s34, %s35
    %p49 = scmp.eq.s32.totalorder %s15, 1
    %p50 = por %p48, %p49
    %p52 = scmp.ne.s32.totalorder %s35, %s51
    %p53 = scmp.eq.s32.totalorder %s15, 0
    %p54 = por %p52, %p53
    %s56 = sadd.s32 %s55, 1
    %p59 = scmp.eq.s32.totalorder %s9, 1
    %p60 = scmp.ne.s32.totalorder %s55, %s57
    %p61 = scmp.eq.s32.totalorder %s9, 0
    %p62 = por %p60, %p61
    %p63 = scmp.ne.s32.totalorder %s55, %s57
    %p64 = scmp.eq.s32.totalorder %s14, 1
    %p65 = por %p63, %p64
    %p66 = scmp.ne.s32.totalorder %s57, %s58
    %p67 = scmp.eq.s32.totalorder %s14, 0
    %p68 = por %p66, %p67
    %p69 = scmp.ne.s32.totalorder %s57, %s58
    %p70 = scmp.eq.s32.totalorder %s15, 1
    %p71 = por %p69, %p70
    %p73 = scmp.ne.s32.totalorder %s58, %s72
    %p74 = scmp.eq.s32.totalorder %s15, 0
    %p75 = por %p73, %p74
    %s77 = sadd.s32 %s76, 1
    %p80 = scmp.eq.s32.totalorder %s9, 1
    %p81 = scmp.ne.s32.totalorder %s76, %s78
    %p82 = scmp.eq.s32.totalorder %s9, 0
    %p83 = por %p81, %p82
    %p84 = scmp.ne.s32.totalorder %s76, %s78
    %p85 = scmp.eq.s32.totalorder %s14, 1
    %p86 = por %p84, %p85
    %p87 = scmp.ne.s32.totalorder %s78, %s79
    %p88 = scmp.eq.s32.totalorder %s14, 0
    %p89 = por %p87, %p88
    %p90 = scmp.ne.s32.totalorder %s78, %s79
    %p91 = scmp.eq.s32.totalorder %s15, 1
    %p92 = por %p90, %p91
    %p94 = scmp.ne.s32.totalorder %s79, %s93
    %p95 = scmp.eq.s32.totalorder %s15, 0
    %p96 = por %p94, %p95
    %s97 = ssub.s32 %s16, %s28
    %s98 = ssub.s32 %s17, %s24
    %s99 = sor.u32 %s97, %s98
    %p100 = scmp.eq.s32.totalorder %s99, 0
    %s102 = sadd.s32 %s101, 1
    %s103 = scalar_select %p100, %s101, %s102
    %p106 = pneg %p100
    %p107 = scmp.eq.s32.totalorder %s9, 1
    %p108 = por %p106, %p107
    %p109 = scmp.ne.s32.totalorder %s101, %s104
    %p110 = scmp.eq.s32.totalorder %s9, 0
    %p111 = por %p109, %p110
    %p112 = scmp.ne.s32.totalorder %s101, %s104
    %p113 = scmp.eq.s32.totalorder %s14, 1
    %p114 = por %p112, %p113
    %p115 = scmp.ne.s32.totalorder %s104, %s105
    %p116 = scmp.eq.s32.totalorder %s14, 0
    %p117 = por %p115, %p116
    %p118 = scmp.ne.s32.totalorder %s104, %s105
    %p119 = scmp.eq.s32.totalorder %s15, 1
    %p120 = por %p118, %p119
    %p122 = scmp.ne.s32.totalorder %s105, %s121
    %p123 = scmp.eq.s32.totalorder %s15, 0
    %p124 = por %p122, %p123
    %p125 = scmp.le.s32.totalorder 1, %s9
    %p126 = scmp.lt.s32.totalorder %s9, 3
    %p127 = pnand %p125, %p126
    %p128 = pneg %p127
    // Predicated region
    $region9: #{multi_head_attention.3} parent=5 // pred_check
      _
    $region10: #{multi_head_attention.3} parent=5 // pred_check_branch
      %130 = sbr.rel (%p127) target = $region12
    $region11: #{multi_head_attention.3} parent=5 // pred_region
      %s131 = ssub.s32 %s9, 1
      // Predicated region
      $region13: #{multi_head_attention.3} parent=11 // pred_check
        %p132 = pneg %p68
      $region14: #{multi_head_attention.3} parent=11 // pred_check_branch
        %134 = sbr.rel (%p132) target = $region16
      $region15: #{multi_head_attention.3} parent=11 // pred_region
        _
      $region16: #{multi_head_attention.3} parent=11 // pred_fallthru
        _
      // Predicated region
      $region17: #{multi_head_attention.3} parent=11 // pred_check
        %p135 = pneg %p89
      $region18: #{multi_head_attention.3} parent=11 // pred_check_branch
        %137 = sbr.rel (%p135) target = $region20
      $region19: #{multi_head_attention.3} parent=11 // pred_region
        _
      $region20: #{multi_head_attention.3} parent=11 // pred_fallthru
        _
    $region12: #{multi_head_attention.3} parent=5 // pred_fallthru
      _
    %p138 = scmp.lt.s32.totalorder %s9, 2
    // Predicated region
    $region21: #{multi_head_attention.3} parent=5 // pred_check
      %p139 = pneg %p138
    $region22: #{multi_head_attention.3} parent=5 // pred_check_branch
      %141 = sbr.rel (%p139) target = $region24
    $region23: #{multi_head_attention.3} parent=5 // pred_region
      // Predicated region
      $region25: #{multi_head_attention.3} parent=23 // pred_check
        %p142 = pneg %p41
      $region26: #{multi_head_attention.3} parent=23 // pred_check_branch
        %144 = sbr.rel (%p142) target = $region28
      $region27: #{multi_head_attention.3} parent=23 // pred_region
        %p145 = scmp.lt.s32.totalorder %s16, 1
        %s146 = scalar_select %p145, %s16, 1
        %s147 = smul.addr %s146, 8
        %s148 = scalar_lea.vmem %s0, %s147
      $region28: #{multi_head_attention.3} parent=23 // pred_fallthru
        _
    $region24: #{multi_head_attention.3} parent=5 // pred_fallthru
      _
    %p149 = scmp.le.s32.totalorder 1, %s9
    %p150 = scmp.lt.s32.totalorder %s9, 3
    %p151 = pnand %p149, %p150
    %p152 = pneg %p151
    // Predicated region
    $region29: #{multi_head_attention.3} parent=5 // pred_check
      _
    $region30: #{multi_head_attention.3} parent=5 // pred_check_branch
      %154 = sbr.rel (%p151) target = $region32
    $region31: #{multi_head_attention.3} parent=5 // pred_region
      %s155 = ssub.s32 %s9, 1
      %p156 = scmp.lt.s32.totalorder %s18, 1
      %s157 = scalar_select %p156, %s18, 1
      %s158 = smul.addr %s157, 8
      %s159 = scalar_lea.vmem %s0, %s158
      %p160 = pneg %p47
      %p161 = pneg %p44
      %p162 = pneg %p68
      %p163 = pneg %p65
      %p164 = pneg %p89
      %p165 = pneg %p86
      %p166 = pneg %p117
      %p167 = pneg %p114
      %p168 = scmp.lt.s32.totalorder %s18, 1
      %s169 = scalar_select %p168, %s18, 1
      %p170 = scmp.lt.s32.totalorder %s19, 0
      %s171 = scalar_select %p170, %s19, 0
      %s172 = sadd.s32 %s171, %s169
      %s173 = smul.addr %s172, 4
      %s174 = scalar_lea.vmem %s3, %s173
      %p175 = scmp.lt.s32.totalorder %s18, 1
      %s176 = scalar_select %p175, %s18, 1
      %s177 = smul.addr %s176, 8
      %s178 = scalar_lea.vmem %s0, %s177
      %p179 = scmp.lt.s32.totalorder %s18, 1
      %s180 = scalar_select %p179, %s18, 1
      %p181 = scmp.lt.s32.totalorder %s19, 0
      %s182 = scalar_select %p181, %s19, 0
      %s183 = sadd.s32 %s182, %s180
      %s184 = smul.addr %s183, 4
      %s185 = scalar_lea.vmem %s3, %s184
      %v187 = vld [vmem:[%s178] sm:$0xff]
      %v188 = vpack.c.bf16 %v187, %v187
      %v189 = vld [vmem:[%s1] sm:$0xf]
      %v190 = vld [vmem:[%s1 + $0x4] sm:$0xf]
      %v191 = vld [vmem:[%s1 + $0x8] sm:$0xf]
      %v192 = vld [vmem:[%s1 + $0xc] sm:$0xf]
      %v193 = vld [vmem:[%s1 + $0x10] sm:$0xf]
      %v194 = vld [vmem:[%s1 + $0x14] sm:$0xf]
      %v195 = vld [vmem:[%s1 + $0x18] sm:$0xf]
      %v196 = vld [vmem:[%s1 + $0x1c] sm:$0xf]
      %v197 = vld [vmem:[%s1 + $0x20] sm:$0xf]
      %v198 = vld [vmem:[%s1 + $0x24] sm:$0xf]
      %v199 = vld [vmem:[%s1 + $0x28] sm:$0xf]
      %v200 = vld [vmem:[%s1 + $0x2c] sm:$0xf]
      %v201 = vld [vmem:[%s2] sm:$0x1]
      %v203 = vlaneseq
      %v204 = vshrl.u32 %v203, 7
      %v205 = vsub.s32 0, %v204
      %v206 = vrot.slane %v201, %v205
      %v220 = vunpack.c.l.b16 %v189
      %v221 = vunpack.c.l.b16 %v190
      %v222 = vunpack.c.l.b16 %v191
      %v223 = vunpack.c.l.b16 %v192
      %v224 = vunpack.c.l.b16 %v193
      %v225 = vunpack.c.l.b16 %v194
      %v226 = vunpack.c.l.b16 %v195
      %v227 = vunpack.c.l.b16 %v196
      %v228 = vunpack.c.l.b16 %v197
      %v229 = vunpack.c.l.b16 %v198
      %v230 = vunpack.c.l.b16 %v199
      %v231 = vunpack.c.l.b16 %v200
      %v232 = vpack.c.b16 %v221, %v220
      %v233 = vpack.c.b16 %v223, %v222
      %v234 = vpack.c.b16 %v225, %v224
      %v235 = vpack.c.b16 %v227, %v226
      %v236 = vpack.c.b16 %v229, %v228
      %v237 = vpack.c.b16 %v231, %v230
      %vm238 = vcmask 261120
      %v240 = vsel %vm238, %v188, 0
      %v243 = vsel %vm238, %v232, 0
      %v246 = vsel %vm238, %v233, 0
      %v249 = vsel %vm238, %v234, 0
      %v252 = vsel %vm238, %v235, 0
      %v255 = vsel %vm238, %v236, 0
      %v258 = vsel %vm238, %v237, 0
      %260 = vmatprep.subr.bf16.mxu0 0
      %261 = vmatpush1.bf16.xpose.msra.mxu0 0
      %262 = vmatprep.subr.bf16.mxu0 0
      %263 = vmatpush1.bf16.xpose.msra.mxu0 0
      %264 = vmatprep.subr.bf16.mxu0 0
      %265 = vmatpush1.bf16.xpose.msra.mxu0 %v258
      %266 = vmatprep.subr.bf16.mxu0 0
      %267 = vmatpush1.bf16.xpose.msra.mxu0 %v255
      %268 = vmatprep.subr.bf16.mxu0 0
      %269 = vmatpush1.bf16.xpose.msra.mxu0 %v252
      %270 = vmatprep.subr.bf16.mxu0 0
      %271 = vmatpush1.bf16.xpose.msra.mxu0 %v249
      %272 = vmatprep.subr.bf16.mxu0 0
      %273 = vmatpush1.bf16.xpose.msra.mxu0 %v246
      %274 = vmatprep.subr.bf16.mxu0 0
      %275 = vmatpush1.bf16.xpose.msra.mxu0 %v243
      %276 = vmatprep.subr.bf16.mxu0 0
      %277 = vmatpush2.bf16.xpose.msra.mxu0 0
      %278 = vmatprep.subr.bf16.mxu0 0
      %279 = vmatpush2.bf16.xpose.msra.mxu0 0
      %280 = vmatprep.subr.bf16.mxu0 0
      %281 = vmatpush2.bf16.xpose.msra.mxu0 0
      %282 = vmatprep.subr.bf16.mxu0 0
      %283 = vmatpush2.bf16.xpose.msra.mxu0 0
      %284 = vmatprep.subr.bf16.mxu0 0
      %285 = vmatpush2.bf16.xpose.msra.mxu0 0
      %286 = vmatprep.subr.bf16.mxu0 0
      %287 = vmatpush2.bf16.xpose.msra.mxu0 0
      %288 = vmatprep.subr.bf16.mxu0 0
      %289 = vmatpush2.bf16.xpose.msra.mxu0 0
      %290 = vmatprep.subr.bf16.mxu0 0
      %291 = vmatpush2.bf16.xpose.msra.mxu0 0
      %292 = vmatprep.mubr.bf16.mxu0 0
      %293 = vmatmul.mubr.bf16.gmra.mxu0 %v240
      %v294 = vpop.f32.mrf.mxu0
      %v295 = vadd.f32 %v206, %v294
      %v296 = vpop.f32.mrf.mxu0
      %v297 = vpop.f32.mrf.mxu0
      %v298 = vpop.f32.mrf.mxu0
      %299 = vdwg.mxu0
      %v300 = vpack.c.bf16 %v295, %v295
      %vm301 = vcmask 781312
      %302 = vst.msk [vmem:[%s185] sm:$0xf] %vm301, %v300
      %p303 = scmp.lt.s32.totalorder %s18, 1
      %s304 = scalar_select %p303, %s18, 1
      %p305 = scmp.lt.s32.totalorder %s19, 0
      %s306 = scalar_select %p305, %s19, 0
      %s307 = sadd.s32 %s306, %s304
      %s308 = smul.addr %s307, 4
      %s309 = scalar_lea.vmem %s3, %s308
      // Predicated region
      $region33: #{multi_head_attention.3} parent=31 // pred_check
        %p310 = pneg %p114
      $region34: #{multi_head_attention.3} parent=31 // pred_check_branch
        %312 = sbr.rel (%p310) target = $region36
      $region35: #{multi_head_attention.3} parent=31 // pred_region
        _
      $region36: #{multi_head_attention.3} parent=31 // pred_fallthru
        _
    $region32: #{multi_head_attention.3} parent=5 // pred_fallthru
      _
    %p313 = scmp.le.s32.totalorder 2, %s9
    // Predicated region
    $region37: #{multi_head_attention.3} parent=5 // pred_check
      %p314 = pneg %p313
    $region38: #{multi_head_attention.3} parent=5 // pred_check_branch
      %316 = sbr.rel (%p314) target = $region40
    $region39: #{multi_head_attention.3} parent=5 // pred_region
      %s317 = ssub.s32 %s9, 2
      // Predicated region
      $region41: #{multi_head_attention.3} parent=39 // pred_check
        %p318 = pneg %p120
      $region42: #{multi_head_attention.3} parent=39 // pred_check_branch
        %320 = sbr.rel (%p318) target = $region44
      $region43: #{multi_head_attention.3} parent=39 // pred_region
        %p321 = scmp.lt.s32.totalorder %s20, 1
        %s322 = scalar_select %p321, %s20, 1
        %p323 = scmp.lt.s32.totalorder %s21, 0
        %s324 = scalar_select %p323, %s21, 0
        %s325 = sadd.s32 %s324, %s322
        %s326 = smul.addr %s325, 4
        %s327 = scalar_lea.vmem %s3, %s326
      $region44: #{multi_head_attention.3} parent=39 // pred_fallthru
        _
    $region40: #{multi_head_attention.3} parent=5 // pred_fallthru
      _
  $region6: #{multi_head_attention.3} parent=0 // loop_footer
    %s13 = sadd.s32 1, %s9
  $region7: #{multi_head_attention.3} parent=0 // loop_footer_branch
    %8 = sbr.rel target = $region3
  $region8: #{multi_head_attention.3} parent=0 // loop_exit
    _

// kernel: multi_head_attention.5
$region0: #{multi_head_attention.5}
  #allocation0 [shape = 'u32[]', space=smem, size = 0x4, offset = 0x4, fixed_abs, tag = 'smem constant byte address 0x4 - core index']
  #allocation1 [shape = 'u32[144,128]{1,0:T(1,128)}', space=vmem, size = 0x12000, scoped, tag = 'internal scratch']
  %s0 = inlined_call_operand.vmem [shape: bf16[16,32], index: 0, kind: input, shape index: {}]
  %s1 = inlined_call_operand.vmem [shape: bf16[32,32], index: 1, kind: input, shape index: {}]
  %s2 = inlined_call_operand.vmem [shape: f32[1,32], index: 2, kind: input, shape index: {}]
  %s3 = inlined_call_operand.vmem [shape: f32[16,32], index: 3, kind: input, shape index: {}]
  %s4 = inlined_call_operand.vmem [shape: f32[1,32], index: 4, kind: input, shape index: {}]
  %s5 = inlined_call_operand.vmem [shape: f32[1,32], index: 5, kind: input, shape index: {}]
  %s6 = inlined_call_operand.hbm [shape: f32[16,32], index: 6, kind: output, shape index: {}]
  %s7 = sld [smem:[#allocation0]]
  $region57: #{multi_head_attention.5} parent=0
    _
  %s9 = ssub.s32 1, %s7
  %s10 = scalar_select 0, %s9, %s7
  $region1: #{multi_head_attention.5} parent=0
    #allocation2 [shape = 'u8[8192]{0}', space=vmem, size = 0x2000, scoped, tag = 'output window, operand 0']
    #allocation3 [shape = 's32[2]{0}', space=sflag, size = 0x8, scoped, tag = 'scoped memory for multi_head_attention.5']
    %11 = vsyncpa [#allocation3], 0
    %s12 = scalar_lea.sflag [#allocation3], 1
    %13 = vsyncpa %s12, 0
    loop: start=0, step=1, limit=4
    $region2: #{multi_head_attention.5} parent=1 // loop_pre_header
      _
    $region3: #{multi_head_attention.5} parent=1 // loop_header
      %s15 = sphi 0, %s19
      %p16 = scmp.ge.s32.totalorder %s15, 4
      %s25 = sphi 0, %s27
      %s28 = sphi 0, %s25
      %s29 = sphi 0, %s28
      %s45 = sphi 0, %s29
      %s49 = sphi 0, %s49
      %s51 = sphi 0, %s49
      %s52 = sphi 0, %s51
      %s66 = sphi 0, %s52
      %s70 = sphi 0, %s70
      %s72 = sphi 0, %s70
      %s73 = sphi 0, %s72
      %s87 = sphi 0, %s73
      %s93 = sphi 0, %s95
      %s96 = sphi 0, %s93
      %s97 = sphi 0, %s96
      %s113 = sphi 0, %s97
      %s117 = sphi 0, %s117
      %s119 = sphi 0, %s117
      %s120 = sphi 0, %s119
      %s134 = sphi 0, %s120
      %s138 = sphi 0, %s138
      %s140 = sphi 0, %s138
      %s141 = sphi 0, %s140
      %s155 = sphi 0, %s141
      %s161 = sphi 0, %s163
      %s164 = sphi 0, %s161
      %s165 = sphi 0, %s164
      %s181 = sphi 0, %s165
    $region4: #{multi_head_attention.5} parent=1 // loop_header_branch
      %18 = sbr.rel (%p16) target = $region8
    $region5: #{multi_head_attention.5} parent=1 // loop_body
      %s20 = ssub.s32 %s15, 1
      %s21 = ssub.s32 %s15, 2
      %s22 = sadd.s32 %s15, 1
      %s23 = ssub.s32 %s15, %s22
      %p24 = scmp.eq.s32.totalorder %s23, 0
      %s26 = sadd.s32 %s25, 1
      %s27 = scalar_select %p24, %s25, %s26
      %p30 = pneg %p24
      %p31 = scmp.eq.s32.totalorder %s15, 1
      %p32 = por %p30, %p31
      %p33 = scmp.ne.s32.totalorder %s25, %s28
      %p34 = scmp.eq.s32.totalorder %s15, 0
      %p35 = por %p33, %p34
      %p36 = scmp.ne.s32.totalorder %s25, %s28
      %p37 = scmp.eq.s32.totalorder %s20, 1
      %p38 = por %p36, %p37
      %p39 = scmp.ne.s32.totalorder %s28, %s29
      %p40 = scmp.eq.s32.totalorder %s20, 0
      %p41 = por %p39, %p40
      %p42 = scmp.ne.s32.totalorder %s28, %s29
      %p43 = scmp.eq.s32.totalorder %s21, 1
      %p44 = por %p42, %p43
      %p46 = scmp.ne.s32.totalorder %s29, %s45
      %p47 = scmp.eq.s32.totalorder %s21, 0
      %p48 = por %p46, %p47
      %s50 = sadd.s32 %s49, 1
      %p53 = scmp.eq.s32.totalorder %s15, 1
      %p54 = scmp.ne.s32.totalorder %s49, %s51
      %p55 = scmp.eq.s32.totalorder %s15, 0
      %p56 = por %p54, %p55
      %p57 = scmp.ne.s32.totalorder %s49, %s51
      %p58 = scmp.eq.s32.totalorder %s20, 1
      %p59 = por %p57, %p58
      %p60 = scmp.ne.s32.totalorder %s51, %s52
      %p61 = scmp.eq.s32.totalorder %s20, 0
      %p62 = por %p60, %p61
      %p63 = scmp.ne.s32.totalorder %s51, %s52
      %p64 = scmp.eq.s32.totalorder %s21, 1
      %p65 = por %p63, %p64
      %p67 = scmp.ne.s32.totalorder %s52, %s66
      %p68 = scmp.eq.s32.totalorder %s21, 0
      %p69 = por %p67, %p68
      %s71 = sadd.s32 %s70, 1
      %p74 = scmp.eq.s32.totalorder %s15, 1
      %p75 = scmp.ne.s32.totalorder %s70, %s72
      %p76 = scmp.eq.s32.totalorder %s15, 0
      %p77 = por %p75, %p76
      %p78 = scmp.ne.s32.totalorder %s70, %s72
      %p79 = scmp.eq.s32.totalorder %s20, 1
      %p80 = por %p78, %p79
      %p81 = scmp.ne.s32.totalorder %s72, %s73
      %p82 = scmp.eq.s32.totalorder %s20, 0
      %p83 = por %p81, %p82
      %p84 = scmp.ne.s32.totalorder %s72, %s73
      %p85 = scmp.eq.s32.totalorder %s21, 1
      %p86 = por %p84, %p85
      %p88 = scmp.ne.s32.totalorder %s73, %s87
      %p89 = scmp.eq.s32.totalorder %s21, 0
      %p90 = por %p88, %p89
      %s91 = ssub.s32 %s15, %s22
      %p92 = scmp.eq.s32.totalorder %s91, 0
      %s94 = sadd.s32 %s93, 1
      %s95 = scalar_select %p92, %s93, %s94
      %p98 = pneg %p92
      %p99 = scmp.eq.s32.totalorder %s15, 1
      %p100 = por %p98, %p99
      %p101 = scmp.ne.s32.totalorder %s93, %s96
      %p102 = scmp.eq.s32.totalorder %s15, 0
      %p103 = por %p101, %p102
      %p104 = scmp.ne.s32.totalorder %s93, %s96
      %p105 = scmp.eq.s32.totalorder %s20, 1
      %p106 = por %p104, %p105
      %p107 = scmp.ne.s32.totalorder %s96, %s97
      %p108 = scmp.eq.s32.totalorder %s20, 0
      %p109 = por %p107, %p108
      %p110 = scmp.ne.s32.totalorder %s96, %s97
      %p111 = scmp.eq.s32.totalorder %s21, 1
      %p112 = por %p110, %p111
      %p114 = scmp.ne.s32.totalorder %s97, %s113
      %p115 = scmp.eq.s32.totalorder %s21, 0
      %p116 = por %p114, %p115
      %s118 = sadd.s32 %s117, 1
      %p121 = scmp.eq.s32.totalorder %s15, 1
      %p122 = scmp.ne.s32.totalorder %s117, %s119
      %p123 = scmp.eq.s32.totalorder %s15, 0
      %p124 = por %p122, %p123
      %p125 = scmp.ne.s32.totalorder %s117, %s119
      %p126 = scmp.eq.s32.totalorder %s20, 1
      %p127 = por %p125, %p126
      %p128 = scmp.ne.s32.totalorder %s119, %s120
      %p129 = scmp.eq.s32.totalorder %s20, 0
      %p130 = por %p128, %p129
      %p131 = scmp.ne.s32.totalorder %s119, %s120
      %p132 = scmp.eq.s32.totalorder %s21, 1
      %p133 = por %p131, %p132
      %p135 = scmp.ne.s32.totalorder %s120, %s134
      %p136 = scmp.eq.s32.totalorder %s21, 0
      %p137 = por %p135, %p136
      %s139 = sadd.s32 %s138, 1
      %p142 = scmp.eq.s32.totalorder %s15, 1
      %p143 = scmp.ne.s32.totalorder %s138, %s140
      %p144 = scmp.eq.s32.totalorder %s15, 0
      %p145 = por %p143, %p144
      %p146 = scmp.ne.s32.totalorder %s138, %s140
      %p147 = scmp.eq.s32.totalorder %s20, 1
      %p148 = por %p146, %p147
      %p149 = scmp.ne.s32.totalorder %s140, %s141
      %p150 = scmp.eq.s32.totalorder %s20, 0
      %p151 = por %p149, %p150
      %p152 = scmp.ne.s32.totalorder %s140, %s141
      %p153 = scmp.eq.s32.totalorder %s21, 1
      %p154 = por %p152, %p153
      %p156 = scmp.ne.s32.totalorder %s141, %s155
      %p157 = scmp.eq.s32.totalorder %s21, 0
      %p158 = por %p156, %p157
      %s159 = ssub.s32 %s15, %s22
      %p160 = scmp.eq.s32.totalorder %s159, 0
      %s162 = sadd.s32 %s161, 1
      %s163 = scalar_select %p160, %s161, %s162
      %p166 = pneg %p160
      %p167 = scmp.eq.s32.totalorder %s15, 1
      %p168 = por %p166, %p167
      %p169 = scmp.ne.s32.totalorder %s161, %s164
      %p170 = scmp.eq.s32.totalorder %s15, 0
      %p171 = por %p169, %p170
      %p172 = scmp.ne.s32.totalorder %s161, %s164
      %p173 = scmp.eq.s32.totalorder %s20, 1
      %p174 = por %p172, %p173
      %p175 = scmp.ne.s32.totalorder %s164, %s165
      %p176 = scmp.eq.s32.totalorder %s20, 0
      %p177 = por %p175, %p176
      %p178 = scmp.ne.s32.totalorder %s164, %s165
      %p179 = scmp.eq.s32.totalorder %s21, 1
      %p180 = por %p178, %p179
      %p182 = scmp.ne.s32.totalorder %s165, %s181
      %p183 = scmp.eq.s32.totalorder %s21, 0
      %p184 = por %p182, %p183
      %p185 = scmp.le.s32.totalorder 1, %s15
      %p186 = scmp.lt.s32.totalorder %s15, 3
      %p187 = pnand %p185, %p186
      %p188 = pneg %p187
      // Predicated region
      $region9: #{multi_head_attention.5} parent=5 // pred_check
        _
      $region10: #{multi_head_attention.5} parent=5 // pred_check_branch
        %190 = sbr.rel (%p187) target = $region12
      $region11: #{multi_head_attention.5} parent=5 // pred_region
        %s191 = ssub.s32 %s15, 1
        // Predicated region
        $region13: #{multi_head_attention.5} parent=11 // pred_check
          %p192 = pneg %p62
        $region14: #{multi_head_attention.5} parent=11 // pred_check_branch
          %194 = sbr.rel (%p192) target = $region16
        $region15: #{multi_head_attention.5} parent=11 // pred_region
          _
        $region16: #{multi_head_attention.5} parent=11 // pred_fallthru
          _
        // Predicated region
        $region17: #{multi_head_attention.5} parent=11 // pred_check
          %p195 = pneg %p83
        $region18: #{multi_head_attention.5} parent=11 // pred_check_branch
          %197 = sbr.rel (%p195) target = $region20
        $region19: #{multi_head_attention.5} parent=11 // pred_region
          _
        $region20: #{multi_head_attention.5} parent=11 // pred_fallthru
          _
        // Predicated region
        $region21: #{multi_head_attention.5} parent=11 // pred_check
          %p198 = pneg %p130
        $region22: #{multi_head_attention.5} parent=11 // pred_check_branch
          %200 = sbr.rel (%p198) target = $region24
        $region23: #{multi_head_attention.5} parent=11 // pred_region
          _
        $region24: #{multi_head_attention.5} parent=11 // pred_fallthru
          _
        // Predicated region
        $region25: #{multi_head_attention.5} parent=11 // pred_check
          %p201 = pneg %p151
        $region26: #{multi_head_attention.5} parent=11 // pred_check_branch
          %203 = sbr.rel (%p201) target = $region28
        $region27: #{multi_head_attention.5} parent=11 // pred_region
          _
        $region28: #{multi_head_attention.5} parent=11 // pred_fallthru
          _
      $region12: #{multi_head_attention.5} parent=5 // pred_fallthru
        _
      %p204 = scmp.lt.s32.totalorder %s15, 2
      // Predicated region
      $region29: #{multi_head_attention.5} parent=5 // pred_check
        %p205 = pneg %p204
      $region30: #{multi_head_attention.5} parent=5 // pred_check_branch
        %207 = sbr.rel (%p205) target = $region32
      $region31: #{multi_head_attention.5} parent=5 // pred_region
        // Predicated region
        $region33: #{multi_head_attention.5} parent=31 // pred_check
          %p208 = pneg %p35
        $region34: #{multi_head_attention.5} parent=31 // pred_check_branch
          %210 = sbr.rel (%p208) target = $region36
        $region35: #{multi_head_attention.5} parent=31 // pred_region
          %p211 = scmp.lt.s32.totalorder %s15, 1
          %s212 = scalar_select %p211, %s15, 1
          %s213 = smul.addr %s212, 4
          %s214 = scalar_lea.vmem %s0, %s213
        $region36: #{multi_head_attention.5} parent=31 // pred_fallthru
          _
        // Predicated region
        $region37: #{multi_head_attention.5} parent=31 // pred_check
          %p215 = pneg %p103
        $region38: #{multi_head_attention.5} parent=31 // pred_check_branch
          %217 = sbr.rel (%p215) target = $region40
        $region39: #{multi_head_attention.5} parent=31 // pred_region
          %p218 = scmp.lt.s32.totalorder %s15, 1
          %s219 = scalar_select %p218, %s15, 1
          %s220 = smul.addr %s219, 8
          %s221 = scalar_lea.vmem %s3, %s220
        $region40: #{multi_head_attention.5} parent=31 // pred_fallthru
          _
      $region32: #{multi_head_attention.5} parent=5 // pred_fallthru
        _
      %p222 = scmp.le.s32.totalorder 1, %s15
      %p223 = scmp.lt.s32.totalorder %s15, 3
      %p224 = pnand %p222, %p223
      %p225 = pneg %p224
      // Predicated region
      $region41: #{multi_head_attention.5} parent=5 // pred_check
        _
      $region42: #{multi_head_attention.5} parent=5 // pred_check_branch
        %227 = sbr.rel (%p224) target = $region44
      $region43: #{multi_head_attention.5} parent=5 // pred_region
        %s228 = ssub.s32 %s15, 1
        %p229 = scmp.lt.s32.totalorder %s20, 1
        %s230 = scalar_select %p229, %s20, 1
        %s231 = smul.addr %s230, 4
        %s232 = scalar_lea.vmem %s0, %s231
        %p233 = pneg %p41
        %p234 = pneg %p38
        %p235 = pneg %p62
        %p236 = pneg %p59
        %p237 = pneg %p83
        %p238 = pneg %p80
        %p239 = scmp.lt.s32.totalorder %s20, 1
        %s240 = scalar_select %p239, %s20, 1
        %s241 = smul.addr %s240, 8
        %s242 = scalar_lea.vmem %s3, %s241
        %p243 = pneg %p109
        %p244 = pneg %p106
        %p245 = pneg %p130
        %p246 = pneg %p127
        %p247 = pneg %p151
        %p248 = pneg %p148
        %p249 = pneg %p177
        %p250 = pneg %p174
        %s251 = sand.u32 %s164, 1
        %s252 = scalar_lea.sflag [#allocation3], %s251
        %s253 = sand.u32 %s164, 1
        %s254 = smul.addr %s253, 8
        %s255 = scalar_lea.vmem [#allocation2], %s254
        %p256 = scmp.lt.s32.totalorder %s20, 1
        %s257 = scalar_select %p256, %s20, 1
        %s258 = smul.addr %s257, 4
        %s259 = scalar_lea.vmem %s0, %s258
        %p260 = scmp.lt.s32.totalorder %s20, 1
        %s261 = scalar_select %p260, %s20, 1
        %s262 = smul.addr %s261, 8
        %s263 = scalar_lea.vmem %s3, %s262
        %v265 = vld [vmem:[%s259] sm:$0xf]
        %v266 = vld [vmem:[%s1] sm:$0xf]
        %v267 = vld [vmem:[%s1 + $0x4] sm:$0xf]
        %v268 = vld [vmem:[%s1 + $0x8] sm:$0xf]
        %v269 = vld [vmem:[%s1 + $0xc] sm:$0xf]
        %v270 = vld [vmem:[%s2] sm:$0x1]
        %v272 = vlaneseq
        %v273 = vshrl.u32 %v272, 7
        %v274 = vsub.s32 0, %v273
        %v275 = vrot.slane %v270, %v274
        %v281 = vunpack.c.l.b16 %v266
        %v282 = vunpack.c.l.b16 %v267
        %v283 = vunpack.c.l.b16 %v268
        %v284 = vunpack.c.l.b16 %v269
        %v285 = vpack.c.b16 %v282, %v281
        %v286 = vpack.c.b16 %v284, %v283
        %vm287 = vcmask 261120
        %v289 = vsel %vm287, %v265, 0
        %v292 = vsel %vm287, %v285, 0
        %v295 = vsel %vm287, %v286, 0
        %297 = vmatprep.subr.bf16.mxu0 0
        %298 = vmatpush1.bf16.xpose.msra.mxu0 0
        %299 = vmatprep.subr.bf16.mxu0 0
        %300 = vmatpush1.bf16.xpose.msra.mxu0 0
        %301 = vmatprep.subr.bf16.mxu0 0
        %302 = vmatpush1.bf16.xpose.msra.mxu0 0
        %303 = vmatprep.subr.bf16.mxu0 0
        %304 = vmatpush1.bf16.xpose.msra.mxu0 0
        %305 = vmatprep.subr.bf16.mxu0 0
        %306 = vmatpush1.bf16.xpose.msra.mxu0 0
        %307 = vmatprep.subr.bf16.mxu0 0
        %308 = vmatpush1.bf16.xpose.msra.mxu0 0
        %309 = vmatprep.subr.bf16.mxu0 0
        %310 = vmatpush1.bf16.xpose.msra.mxu0 %v295
        %311 = vmatprep.subr.bf16.mxu0 0
        %312 = vmatpush1.bf16.xpose.msra.mxu0 %v292
        %313 = vmatprep.subr.bf16.mxu0 0
        %314 = vmatpush2.bf16.xpose.msra.mxu0 0
        %315 = vmatprep.subr.bf16.mxu0 0
        %316 = vmatpush2.bf16.xpose.msra.mxu0 0
        %317 = vmatprep.subr.bf16.mxu0 0
        %318 = vmatpush2.bf16.xpose.msra.mxu0 0
        %319 = vmatprep.subr.bf16.mxu0 0
        %320 = vmatpush2.bf16.xpose.msra.mxu0 0
        %321 = vmatprep.subr.bf16.mxu0 0
        %322 = vmatpush2.bf16.xpose.msra.mxu0 0
        %323 = vmatprep.subr.bf16.mxu0 0
        %324 = vmatpush2.bf16.xpose.msra.mxu0 0
        %325 = vmatprep.subr.bf16.mxu0 0
        %326 = vmatpush2.bf16.xpose.msra.mxu0 0
        %327 = vmatprep.subr.bf16.mxu0 0
        %328 = vmatpush2.bf16.xpose.msra.mxu0 0
        %329 = vmatprep.mubr.bf16.mxu0 0
        %330 = vmatmul.mubr.bf16.gmra.mxu0 %v289
        %v331 = vpop.f32.mrf.mxu0
        %v332 = vadd.f32 %v275, %v331
        %v333 = vpop.f32.mrf.mxu0
        %v334 = vpop.f32.mrf.mxu0
        %v335 = vpop.f32.mrf.mxu0
        %336 = vdwg.mxu0
        %v337 = vld [vmem:[%s263] sm:$0xff]
        %v338 = vadd.f32 %v332, %v337
        %v339 = vsel %vm287, %v338, 0.0
        %340 = vadd.xlane.f32.xlu0 %v339
        %v341 = vpop.xlane.xlu0 %340
        %v342 = vrcp.pop 32.0
        %v343 = vmul.f32 %v341, %v342
        %v344 = vsub.f32 %v338, %v343
        %v345 = vmul.f32 %v344, %v344
        %v346 = vsel %vm287, %v345, 0.0
        %347 = vadd.xlane.f32.xlu0 %v346
        %v348 = vpop.xlane.xlu0 %347
        %v349 = vmul.f32 %v348, %v342
        %v350 = vadd.f32 %v349, 1e-05
        %v351 = vrsqrt.pop %v350
        %v352 = vmul.f32 %v344, %v351
        %v353 = vld [vmem:[%s4] sm:$0x1]
        %v355 = vlaneseq
        %v356 = vshrl.u32 %v355, 7
        %v357 = vsub.s32 0, %v356
        %v358 = vrot.slane %v353, %v357
        %v360 = vmul.f32 %v352, %v358
        %v361 = vld [vmem:[%s5] sm:$0x1]
        %v363 = vlaneseq
        %v364 = vshrl.u32 %v363, 7
        %v365 = vsub.s32 0, %v364
        %v366 = vrot.slane %v361, %v365
        %v368 = vadd.f32 %v360, %v366
        %369 = vst.msk [vmem:[%s255] sm:$0xff] %vm287, %v368
        %s370 = sand.u32 %s164, 1
        %s371 = scalar_lea.sflag [#allocation3], %s370
        %s372 = sand.u32 %s164, 1
        %s373 = smul.addr %s372, 8
        %s374 = scalar_lea.vmem [#allocation2], %s373
        // Predicated region
        $region45: #{multi_head_attention.5} parent=43 // pred_check
          %p375 = pneg %p174
        $region46: #{multi_head_attention.5} parent=43 // pred_check_branch
          %377 = sbr.rel (%p375) target = $region48
        $region47: #{multi_head_attention.5} parent=43 // pred_region
          %s379 = ssub.s32 128, 128
          %380 = vsyncadd %s371, %s379
          %s381 = smul.addr %s20, 128
          %s382 = scalar_lea.hbm %s6, %s381
          %s384 = sshll.u32 %s374, 4
          %s385 = int_to_ptr.vmem [resolvable:$true] %s384
          %387 = dma.vmem_to_hbm [thread:$0]  %s385, 128, %s382, %s371
        $region48: #{multi_head_attention.5} parent=43 // pred_fallthru
          _
      $region44: #{multi_head_attention.5} parent=5 // pred_fallthru
        _
      %p388 = scmp.le.s32.totalorder 2, %s15
      // Predicated region
      $region49: #{multi_head_attention.5} parent=5 // pred_check
        %p389 = pneg %p388
      $region50: #{multi_head_attention.5} parent=5 // pred_check_branch
        %391 = sbr.rel (%p389) target = $region52
      $region51: #{multi_head_attention.5} parent=5 // pred_region
        %s392 = ssub.s32 %s15, 2
        // Predicated region
        $region53: #{multi_head_attention.5} parent=51 // pred_check
          %p393 = pneg %p180
        $region54: #{multi_head_attention.5} parent=51 // pred_check_branch
          %395 = sbr.rel (%p393) target = $region56
        $region55: #{multi_head_attention.5} parent=51 // pred_region
          %s396 = sand.u32 %s165, 1
          %s397 = scalar_lea.sflag [#allocation3], %s396
          %s398 = sand.u32 %s165, 1
          %s399 = smul.addr %s398, 8
          %s400 = scalar_lea.vmem [#allocation2], %s399
          %401 = dma.done %s397, 128
        $region56: #{multi_head_attention.5} parent=51 // pred_fallthru
          _
      $region52: #{multi_head_attention.5} parent=5 // pred_fallthru
        _
    $region6: #{multi_head_attention.5} parent=1 // loop_footer
      %s19 = sadd.s32 1, %s15
    $region7: #{multi_head_attention.5} parent=1 // loop_footer_branch
      %14 = sbr.rel target = $region3
    $region8: #{multi_head_attention.5} parent=1 // loop_exit
      _
    %402 = vsyncpa [#allocation3], 1
    %s403 = scalar_lea.sflag [#allocation3], 1
    %404 = vsyncpa %s403, 1

// kernel: multi_head_attention.4
$region0: #{multi_head_attention.4}
  #allocation0 [shape = 'u32[]', space=smem, size = 0x4, offset = 0x4, fixed_abs, tag = 'smem constant byte address 0x4 - core index']
  #allocation1 [shape = 'u32[144,128]{1,0:T(1,128)}', space=vmem, size = 0x12000, scoped, tag = 'internal scratch']
  #allocation2 [shape = 'f32[4,8]{1,0:T(4,128)}', space=vmem, size = 0x800, scoped, tag = 'scratch operand']
  #allocation3 [shape = 'f32[4,8]{1,0:T(4,128)}', space=vmem, size = 0x800, scoped, tag = 'scratch operand']
  #allocation4 [shape = 'f32[4,8,8]{2,1,0:T(8,128)}', space=vmem, size = 0x4000, scoped, tag = 'scratch operand']
  %s0 = inlined_call_operand.vmem [shape: bf16[8,8,8], index: 0, kind: input, shape index: {}]
  %s1 = inlined_call_operand.vmem [shape: bf16[8,8,8], index: 1, kind: input, shape index: {}]
  %s2 = inlined_call_operand.vmem [shape: bf16[8,8,8], index: 2, kind: input, shape index: {}]
  %s3 = inlined_call_operand.vmem [shape: bf16[8,8,8], index: 3, kind: output, shape index: {}]
  %s4 = sld [smem:[#allocation0]]
  $region53: #{multi_head_attention.4} parent=0
    _
  %s6 = ssub.s32 1, %s4
  %s7 = scalar_select 0, %s6, %s4
  loop: start=0, step=1, limit=4
  $region2: #{multi_head_attention.4} parent=0 // loop_pre_header
    _
  $region3: #{multi_head_attention.4} parent=0 // loop_header
    %s9 = sphi 0, %s13
    %p10 = scmp.ge.s32.totalorder %s9, 4
    %s16 = sphi 0, %s35
    %s17 = sphi 0, %s31
    %s18 = sphi 0, %s27
    %s19 = sphi 0, %s16
    %s20 = sphi 0, %s17
    %s21 = sphi 0, %s18
    %s22 = sphi 0, %s19
    %s23 = sphi 0, %s20
    %s24 = sphi 0, %s21
    %s40 = sphi 0, %s42
    %s43 = sphi 0, %s40
    %s44 = sphi 0, %s43
    %s60 = sphi 0, %s44
    %s68 = sphi 0, %s70
    %s71 = sphi 0, %s68
    %s72 = sphi 0, %s71
    %s88 = sphi 0, %s72
    %s96 = sphi 0, %s98
    %s99 = sphi 0, %s96
    %s100 = sphi 0, %s99
    %s116 = sphi 0, %s100
    %s124 = sphi 0, %s126
    %s127 = sphi 0, %s124
    %s128 = sphi 0, %s127
    %s144 = sphi 0, %s128
  $region4: #{multi_head_attention.4} parent=0 // loop_header_branch
    %12 = sbr.rel (%p10) target = $region8
  $region5: #{multi_head_attention.4} parent=0 // loop_body
    %s14 = ssub.s32 %s9, 1
    %s15 = ssub.s32 %s9, 2
    %s25 = sadd.s32 1, %s18
    %p26 = scmp.ge.s32.totalorder %s25, 1
    %s27 = scalar_select %p26, 0, %s25
    %s28 = sadd.s32 1, %s17
    %s29 = scalar_select %p26, %s28, %s17
    %p30 = scmp.ge.s32.totalorder %s29, 1
    %s31 = scalar_select %p30, 0, %s29
    %s32 = sadd.s32 1, %s16
    %s33 = scalar_select %p30, %s32, %s16
    %p34 = scmp.ge.s32.totalorder %s33, 2
    %s35 = scalar_select %p34, 0, %s33
    %s36 = ssub.s32 %s16, %s35
    %s37 = ssub.s32 %s17, %s31
    %s38 = sor.u32 %s36, %s37
    %p39 = scmp.eq.s32.totalorder %s38, 0
    %s41 = sadd.s32 %s40, 1
    %s42 = scalar_select %p39, %s40, %s41
    %p45 = pneg %p39
    %p46 = scmp.eq.s32.totalorder %s9, 1
    %p47 = por %p45, %p46
    %p48 = scmp.ne.s32.totalorder %s40, %s43
    %p49 = scmp.eq.s32.totalorder %s9, 0
    %p50 = por %p48, %p49
    %p51 = scmp.ne.s32.totalorder %s40, %s43
    %p52 = scmp.eq.s32.totalorder %s14, 1
    %p53 = por %p51, %p52
    %p54 = scmp.ne.s32.totalorder %s43, %s44
    %p55 = scmp.eq.s32.totalorder %s14, 0
    %p56 = por %p54, %p55
    %p57 = scmp.ne.s32.totalorder %s43, %s44
    %p58 = scmp.eq.s32.totalorder %s15, 1
    %p59 = por %p57, %p58
    %p61 = scmp.ne.s32.totalorder %s44, %s60
    %p62 = scmp.eq.s32.totalorder %s15, 0
    %p63 = por %p61, %p62
    %s64 = ssub.s32 %s16, %s35
    %s65 = ssub.s32 %s18, %s27
    %s66 = sor.u32 %s64, %s65
    %p67 = scmp.eq.s32.totalorder %s66, 0
    %s69 = sadd.s32 %s68, 1
    %s70 = scalar_select %p67, %s68, %s69
    %p73 = pneg %p67
    %p74 = scmp.eq.s32.totalorder %s9, 1
    %p75 = por %p73, %p74
    %p76 = scmp.ne.s32.totalorder %s68, %s71
    %p77 = scmp.eq.s32.totalorder %s9, 0
    %p78 = por %p76, %p77
    %p79 = scmp.ne.s32.totalorder %s68, %s71
    %p80 = scmp.eq.s32.totalorder %s14, 1
    %p81 = por %p79, %p80
    %p82 = scmp.ne.s32.totalorder %s71, %s72
    %p83 = scmp.eq.s32.totalorder %s14, 0
    %p84 = por %p82, %p83
    %p85 = scmp.ne.s32.totalorder %s71, %s72
    %p86 = scmp.eq.s32.totalorder %s15, 1
    %p87 = por %p85, %p86
    %p89 = scmp.ne.s32.totalorder %s72, %s88
    %p90 = scmp.eq.s32.totalorder %s15, 0
    %p91 = por %p89, %p90
    %s92 = ssub.s32 %s16, %s35
    %s93 = ssub.s32 %s18, %s27
    %s94 = sor.u32 %s92, %s93
    %p95 = scmp.eq.s32.totalorder %s94, 0
    %s97 = sadd.s32 %s96, 1
    %s98 = scalar_select %p95, %s96, %s97
    %p101 = pneg %p95
    %p102 = scmp.eq.s32.totalorder %s9, 1
    %p103 = por %p101, %p102
    %p104 = scmp.ne.s32.totalorder %s96, %s99
    %p105 = scmp.eq.s32.totalorder %s9, 0
    %p106 = por %p104, %p105
    %p107 = scmp.ne.s32.totalorder %s96, %s99
    %p108 = scmp.eq.s32.totalorder %s14, 1
    %p109 = por %p107, %p108
    %p110 = scmp.ne.s32.totalorder %s99, %s100
    %p111 = scmp.eq.s32.totalorder %s14, 0
    %p112 = por %p110, %p111
    %p113 = scmp.ne.s32.totalorder %s99, %s100
    %p114 = scmp.eq.s32.totalorder %s15, 1
    %p115 = por %p113, %p114
    %p117 = scmp.ne.s32.totalorder %s100, %s116
    %p118 = scmp.eq.s32.totalorder %s15, 0
    %p119 = por %p117, %p118
    %s120 = ssub.s32 %s16, %s35
    %s121 = ssub.s32 %s17, %s31
    %s122 = sor.u32 %s120, %s121
    %p123 = scmp.eq.s32.totalorder %s122, 0
    %s125 = sadd.s32 %s124, 1
    %s126 = scalar_select %p123, %s124, %s125
    %p129 = pneg %p123
    %p130 = scmp.eq.s32.totalorder %s9, 1
    %p131 = por %p129, %p130
    %p132 = scmp.ne.s32.totalorder %s124, %s127
    %p133 = scmp.eq.s32.totalorder %s9, 0
    %p134 = por %p132, %p133
    %p135 = scmp.ne.s32.totalorder %s124, %s127
    %p136 = scmp.eq.s32.totalorder %s14, 1
    %p137 = por %p135, %p136
    %p138 = scmp.ne.s32.totalorder %s127, %s128
    %p139 = scmp.eq.s32.totalorder %s14, 0
    %p140 = por %p138, %p139
    %p141 = scmp.ne.s32.totalorder %s127, %s128
    %p142 = scmp.eq.s32.totalorder %s15, 1
    %p143 = por %p141, %p142
    %p145 = scmp.ne.s32.totalorder %s128, %s144
    %p146 = scmp.eq.s32.totalorder %s15, 0
    %p147 = por %p145, %p146
    %p148 = scmp.le.s32.totalorder 1, %s9
    %p149 = scmp.lt.s32.totalorder %s9, 3
    %p150 = pnand %p148, %p149
    %p151 = pneg %p150
    // Predicated region
    $region9: #{multi_head_attention.4} parent=5 // pred_check
      _
    $region10: #{multi_head_attention.4} parent=5 // pred_check_branch
      %153 = sbr.rel (%p150) target = $region12
    $region11: #{multi_head_attention.4} parent=5 // pred_region
      %s154 = ssub.s32 %s9, 1
    $region12: #{multi_head_attention.4} parent=5 // pred_fallthru
      _
    %p155 = scmp.lt.s32.totalorder %s9, 2
    // Predicated region
    $region13: #{multi_head_attention.4} parent=5 // pred_check
      %p156 = pneg %p155
    $region14: #{multi_head_attention.4} parent=5 // pred_check_branch
      %158 = sbr.rel (%p156) target = $region16
    $region15: #{multi_head_attention.4} parent=5 // pred_region
      // Predicated region
      $region17: #{multi_head_attention.4} parent=15 // pred_check
        %p159 = pneg %p50
      $region18: #{multi_head_attention.4} parent=15 // pred_check_branch
        %161 = sbr.rel (%p159) target = $region20
      $region19: #{multi_head_attention.4} parent=15 // pred_region
        %s162 = smul.u32 4, %s16
        %p163 = scmp.lt.s32.totalorder %s162, 7
        %s164 = scalar_select %p163, %s162, 7
        %p165 = scmp.lt.s32.totalorder %s17, 0
        %s166 = scalar_select %p165, %s17, 0
        %s167 = sadd.s32 %s166, %s164
        %s168 = smul.addr %s167, 4
        %s169 = scalar_lea.vmem %s0, %s168
        %s170 = smul.u32 4, %s16
      $region20: #{multi_head_attention.4} parent=15 // pred_fallthru
        _
      // Predicated region
      $region21: #{multi_head_attention.4} parent=15 // pred_check
        %p171 = pneg %p78
      $region22: #{multi_head_attention.4} parent=15 // pred_check_branch
        %173 = sbr.rel (%p171) target = $region24
      $region23: #{multi_head_attention.4} parent=15 // pred_region
        %s174 = smul.u32 4, %s16
        %p175 = scmp.lt.s32.totalorder %s174, 7
        %s176 = scalar_select %p175, %s174, 7
        %p177 = scmp.lt.s32.totalorder %s18, 0
        %s178 = scalar_select %p177, %s18, 0
        %s179 = sadd.s32 %s178, %s176
        %s180 = smul.addr %s179, 4
        %s181 = scalar_lea.vmem %s1, %s180
        %s182 = smul.u32 4, %s16
      $region24: #{multi_head_attention.4} parent=15 // pred_fallthru
        _
      // Predicated region
      $region25: #{multi_head_attention.4} parent=15 // pred_check
        %p183 = pneg %p106
      $region26: #{multi_head_attention.4} parent=15 // pred_check_branch
        %185 = sbr.rel (%p183) target = $region28
      $region27: #{multi_head_attention.4} parent=15 // pred_region
        %s186 = smul.u32 4, %s16
        %p187 = scmp.lt.s32.totalorder %s186, 7
        %s188 = scalar_select %p187, %s186, 7
        %p189 = scmp.lt.s32.totalorder %s18, 0
        %s190 = scalar_select %p189, %s18, 0
        %s191 = sadd.s32 %s190, %s188
        %s192 = smul.addr %s191, 4
        %s193 = scalar_lea.vmem %s2, %s192
        %s194 = smul.u32 4, %s16
      $region28: #{multi_head_attention.4} parent=15 // pred_fallthru
        _
    $region16: #{multi_head_attention.4} parent=5 // pred_fallthru
      _
    %p195 = scmp.le.s32.totalorder 1, %s9
    %p196 = scmp.lt.s32.totalorder %s9, 3
    %p197 = pnand %p195, %p196
    %p198 = pneg %p197
    // Predicated region
    $region29: #{multi_head_attention.4} parent=5 // pred_check
      _
    $region30: #{multi_head_attention.4} parent=5 // pred_check_branch
      %200 = sbr.rel (%p197) target = $region32
    $region31: #{multi_head_attention.4} parent=5 // pred_region
      %s201 = ssub.s32 %s9, 1
      %s202 = smul.u32 4, %s19
      %p203 = scmp.lt.s32.totalorder %s202, 7
      %s204 = scalar_select %p203, %s202, 7
      %p205 = scmp.lt.s32.totalorder %s20, 0
      %s206 = scalar_select %p205, %s20, 0
      %s207 = sadd.s32 %s206, %s204
      %s208 = smul.addr %s207, 4
      %s209 = scalar_lea.vmem %s0, %s208
      %p210 = pneg %p56
      %p211 = pneg %p53
      %s212 = smul.u32 4, %s19
      %p213 = scmp.lt.s32.totalorder %s212, 7
      %s214 = scalar_select %p213, %s212, 7
      %p215 = scmp.lt.s32.totalorder %s21, 0
      %s216 = scalar_select %p215, %s21, 0
      %s217 = sadd.s32 %s216, %s214
      %s218 = smul.addr %s217, 4
      %s219 = scalar_lea.vmem %s1, %s218
      %p220 = pneg %p84
      %p221 = pneg %p81
      %s222 = smul.u32 4, %s19
      %p223 = scmp.lt.s32.totalorder %s222, 7
      %s224 = scalar_select %p223, %s222, 7
      %p225 = scmp.lt.s32.totalorder %s21, 0
      %s226 = scalar_select %p225, %s21, 0
      %s227 = sadd.s32 %s226, %s224
      %s228 = smul.addr %s227, 4
      %s229 = scalar_lea.vmem %s2, %s228
      %p230 = pneg %p112
      %p231 = pneg %p109
      %p232 = pneg %p140
      %p233 = pneg %p137
      %s234 = smul.u32 4, %s19
      %p235 = scmp.lt.s32.totalorder %s234, 7
      %s236 = scalar_select %p235, %s234, 7
      %p237 = scmp.lt.s32.totalorder %s20, 0
      %s238 = scalar_select %p237, %s20, 0
      %s239 = sadd.s32 %s238, %s236
      %s240 = smul.addr %s239, 4
      %s241 = scalar_lea.vmem %s3, %s240
      %s242 = smul.u32 4, %s19
      %p243 = scmp.lt.s32.totalorder %s242, 7
      %s244 = scalar_select %p243, %s242, 7
      %p245 = scmp.lt.s32.totalorder %s20, 0
      %s246 = scalar_select %p245, %s20, 0
      %s247 = sadd.s32 %s246, %s244
      %s248 = smul.addr %s247, 4
      %s249 = scalar_lea.vmem %s0, %s248
      %s250 = smul.u32 4, %s19
      %s251 = smul.u32 4, %s19
      %p252 = scmp.lt.s32.totalorder %s251, 7
      %s253 = scalar_select %p252, %s251, 7
      %p254 = scmp.lt.s32.totalorder %s21, 0
      %s255 = scalar_select %p254, %s21, 0
      %s256 = sadd.s32 %s255, %s253
      %s257 = smul.addr %s256, 4
      %s258 = scalar_lea.vmem %s1, %s257
      %s259 = smul.u32 4, %s19
      %s260 = smul.u32 4, %s19
      %p261 = scmp.lt.s32.totalorder %s260, 7
      %s262 = scalar_select %p261, %s260, 7
      %p263 = scmp.lt.s32.totalorder %s21, 0
      %s264 = scalar_select %p263, %s21, 0
      %s265 = sadd.s32 %s264, %s262
      %s266 = smul.addr %s265, 4
      %s267 = scalar_lea.vmem %s2, %s266
      %s268 = smul.u32 4, %s19
      %s269 = smul.u32 4, %s19
      %p270 = scmp.lt.s32.totalorder %s269, 7
      %s271 = scalar_select %p270, %s269, 7
      %p272 = scmp.lt.s32.totalorder %s20, 0
      %s273 = scalar_select %p272, %s20, 0
      %s274 = sadd.s32 %s273, %s271
      %s275 = smul.addr %s274, 4
      %s276 = scalar_lea.vmem %s3, %s275
      %s277 = smul.u32 4, %s19
      %p279 = scmp.eq.s32.totalorder %s21, 0
      // Predicated region
      $region33: #{multi_head_attention.4} parent=31 // pred_check
        %p280 = pneg %p279
      $region34: #{multi_head_attention.4} parent=31 // pred_check_branch
        %282 = sbr.rel (%p280) target = $region36
      $region35: #{multi_head_attention.4} parent=31 // pred_region
        %vm283 = vcmask 60416
        %284 = vst.msk [vmem:[#allocation2] sm:$0xf] %vm283, -inf
        %285 = vst.msk [vmem:[#allocation3] sm:$0xf] %vm283, 0.0
        %vm286 = vcmask 64512
        %287 = vst.msk [vmem:[#allocation4] sm:$0xff] %vm286, 0.0
        %288 = vst.msk [vmem:[#allocation4 + $0x8] sm:$0xff] %vm286, 0.0
        %289 = vst.msk [vmem:[#allocation4 + $0x10] sm:$0xff] %vm286, 0.0
        %290 = vst.msk [vmem:[#allocation4 + $0x18] sm:$0xff] %vm286, 0.0
      $region36: #{multi_head_attention.4} parent=31 // pred_fallthru
        _
      %v291 = vld [vmem:[%s249] sm:$0xf]
      %v292 = vld [vmem:[%s249 + $0x4] sm:$0xf]
      %v293 = vld [vmem:[%s249 + $0x8] sm:$0xf]
      %v294 = vld [vmem:[%s249 + $0xc] sm:$0xf]
      %v295 = vld [vmem:[%s258] sm:$0xf]
      %v296 = vld [vmem:[%s258 + $0x4] sm:$0xf]
      %v297 = vld [vmem:[%s258 + $0x8] sm:$0xf]
      %v298 = vld [vmem:[%s258 + $0xc] sm:$0xf]
      %vm299 = vcmask 64512
      %v301 = vsel %vm299, %v291, 0
      %v304 = vsel %vm299, %v295, 0
      %306 = vmatprep.subr.bf16.mxu0 0
      %307 = vmatpush1.bf16.xpose.msra.mxu0 0
      %308 = vmatprep.subr.bf16.mxu0 0
      %309 = vmatpush1.bf16.xpose.msra.mxu0 0
      %310 = vmatprep.subr.bf16.mxu0 0
      %311 = vmatpush1.bf16.xpose.msra.mxu0 0
      %312 = vmatprep.subr.bf16.mxu0 0
      %313 = vmatpush1.bf16.xpose.msra.mxu0 0
      %314 = vmatprep.subr.bf16.mxu0 0
      %315 = vmatpush1.bf16.xpose.msra.mxu0 0
      %316 = vmatprep.subr.bf16.mxu0 0
      %317 = vmatpush1.bf16.xpose.msra.mxu0 0
      %318 = vmatprep.subr.bf16.mxu0 0
      %319 = vmatpush1.bf16.xpose.msra.mxu0 0
      %320 = vmatprep.subr.bf16.mxu0 0
      %321 = vmatpush1.bf16.xpose.msra.mxu0 %v304
      %322 = vmatprep.subr.bf16.mxu0 0
      %323 = vmatpush2.bf16.xpose.msra.mxu0 0
      %324 = vmatprep.subr.bf16.mxu0 0
      %325 = vmatpush2.bf16.xpose.msra.mxu0 0
      %326 = vmatprep.subr.bf16.mxu0 0
      %327 = vmatpush2.bf16.xpose.msra.mxu0 0
      %328 = vmatprep.subr.bf16.mxu0 0
      %329 = vmatpush2.bf16.xpose.msra.mxu0 0
      %330 = vmatprep.subr.bf16.mxu0 0
      %331 = vmatpush2.bf16.xpose.msra.mxu0 0
      %332 = vmatprep.subr.bf16.mxu0 0
      %333 = vmatpush2.bf16.xpose.msra.mxu0 0
      %334 = vmatprep.subr.bf16.mxu0 0
      %335 = vmatpush2.bf16.xpose.msra.mxu0 0
      %336 = vmatprep.subr.bf16.mxu0 0
      %337 = vmatpush2.bf16.xpose.msra.mxu0 0
      %338 = vmatprep.mubr.bf16.mxu0 0
      %339 = vmatmul.mubr.bf16.gmra.mxu0 %v301
      %v340 = vpop.f32.mrf.mxu0
      %v341 = vadd.f32 0.0, %v340
      %v342 = vpop.f32.mrf.mxu0
      %v343 = vpop.f32.mrf.mxu0
      %v344 = vpop.f32.mrf.mxu0
      %345 = vdwg.mxu0
      %v347 = vsel %vm299, %v292, 0
      %v350 = vsel %vm299, %v296, 0
      %352 = vmatprep.subr.bf16.mxu0 0
      %353 = vmatpush1.bf16.xpose.msra.mxu0 0
      %354 = vmatprep.subr.bf16.mxu0 0
      %355 = vmatpush1.bf16.xpose.msra.mxu0 0
      %356 = vmatprep.subr.bf16.mxu0 0
      %357 = vmatpush1.bf16.xpose.msra.mxu0 0
      %358 = vmatprep.subr.bf16.mxu0 0
      %359 = vmatpush1.bf16.xpose.msra.mxu0 0
      %360 = vmatprep.subr.bf16.mxu0 0
      %361 = vmatpush1.bf16.xpose.msra.mxu0 0
      %362 = vmatprep.subr.bf16.mxu0 0
      %363 = vmatpush1.bf16.xpose.msra.mxu0 0
      %364 = vmatprep.subr.bf16.mxu0 0
      %365 = vmatpush1.bf16.xpose.msra.mxu0 0
      %366 = vmatprep.subr.bf16.mxu0 0
      %367 = vmatpush1.bf16.xpose.msra.mxu0 %v350
      %368 = vmatprep.subr.bf16.mxu0 0
      %369 = vmatpush2.bf16.xpose.msra.mxu0 0
      %370 = vmatprep.subr.bf16.mxu0 0
      %371 = vmatpush2.bf16.xpose.msra.mxu0 0
      %372 = vmatprep.subr.bf16.mxu0 0
      %373 = vmatpush2.bf16.xpose.msra.mxu0 0
      %374 = vmatprep.subr.bf16.mxu0 0
      %375 = vmatpush2.bf16.xpose.msra.mxu0 0
      %376 = vmatprep.subr.bf16.mxu0 0
      %377 = vmatpush2.bf16.xpose.msra.mxu0 0
      %378 = vmatprep.subr.bf16.mxu0 0
      %379 = vmatpush2.bf16.xpose.msra.mxu0 0
      %380 = vmatprep.subr.bf16.mxu0 0
      %381 = vmatpush2.bf16.xpose.msra.mxu0 0
      %382 = vmatprep.subr.bf16.mxu0 0
      %383 = vmatpush2.bf16.xpose.msra.mxu0 0
      %384 = vmatprep.mubr.bf16.mxu0 0
      %385 = vmatmul.mubr.bf16.gmra.mxu0 %v347
      %v386 = vpop.f32.mrf.mxu0
      %v387 = vadd.f32 0.0, %v386
      %v388 = vpop.f32.mrf.mxu0
      %v389 = vpop.f32.mrf.mxu0
      %v390 = vpop.f32.mrf.mxu0
      %391 = vdwg.mxu0
      %v393 = vsel %vm299, %v293, 0
      %v396 = vsel %vm299, %v297, 0
      %398 = vmatprep.subr.bf16.mxu0 0
      %399 = vmatpush1.bf16.xpose.msra.mxu0 0
      %400 = vmatprep.subr.bf16.mxu0 0
      %401 = vmatpush1.bf16.xpose.msra.mxu0 0
      %402 = vmatprep.subr.bf16.mxu0 0
      %403 = vmatpush1.bf16.xpose.msra.mxu0 0
      %404 = vmatprep.subr.bf16.mxu0 0
      %405 = vmatpush1.bf16.xpose.msra.mxu0 0
      %406 = vmatprep.subr.bf16.mxu0 0
      %407 = vmatpush1.bf16.xpose.msra.mxu0 0
      %408 = vmatprep.subr.bf16.mxu0 0
      %409 = vmatpush1.bf16.xpose.msra.mxu0 0
      %410 = vmatprep.subr.bf16.mxu0 0
      %411 = vmatpush1.bf16.xpose.msra.mxu0 0
      %412 = vmatprep.subr.bf16.mxu0 0
      %413 = vmatpush1.bf16.xpose.msra.mxu0 %v396
      %414 = vmatprep.subr.bf16.mxu0 0
      %415 = vmatpush2.bf16.xpose.msra.mxu0 0
      %416 = vmatprep.subr.bf16.mxu0 0
      %417 = vmatpush2.bf16.xpose.msra.mxu0 0
      %418 = vmatprep.subr.bf16.mxu0 0
      %419 = vmatpush2.bf16.xpose.msra.mxu0 0
      %420 = vmatprep.subr.bf16.mxu0 0
      %421 = vmatpush2.bf16.xpose.msra.mxu0 0
      %422 = vmatprep.subr.bf16.mxu0 0
      %423 = vmatpush2.bf16.xpose.msra.mxu0 0
      %424 = vmatprep.subr.bf16.mxu0 0
      %425 = vmatpush2.bf16.xpose.msra.mxu0 0
      %426 = vmatprep.subr.bf16.mxu0 0
      %427 = vmatpush2.bf16.xpose.msra.mxu0 0
      %428 = vmatprep.subr.bf16.mxu0 0
      %429 = vmatpush2.bf16.xpose.msra.mxu0 0
      %430 = vmatprep.mubr.bf16.mxu0 0
      %431 = vmatmul.mubr.bf16.gmra.mxu0 %v393
      %v432 = vpop.f32.mrf.mxu0
      %v433 = vadd.f32 0.0, %v432
      %v434 = vpop.f32.mrf.mxu0
      %v435 = vpop.f32.mrf.mxu0
      %v436 = vpop.f32.mrf.mxu0
      %437 = vdwg.mxu0
      %v439 = vsel %vm299, %v294, 0
      %v442 = vsel %vm299, %v298, 0
      %444 = vmatprep.subr.bf16.mxu0 0
      %445 = vmatpush1.bf16.xpose.msra.mxu0 0
      %446 = vmatprep.subr.bf16.mxu0 0
      %447 = vmatpush1.bf16.xpose.msra.mxu0 0
      %448 = vmatprep.subr.bf16.mxu0 0
      %449 = vmatpush1.bf16.xpose.msra.mxu0 0
      %450 = vmatprep.subr.bf16.mxu0 0
      %451 = vmatpush1.bf16.xpose.msra.mxu0 0
      %452 = vmatprep.subr.bf16.mxu0 0
      %453 = vmatpush1.bf16.xpose.msra.mxu0 0
      %454 = vmatprep.subr.bf16.mxu0 0
      %455 = vmatpush1.bf16.xpose.msra.mxu0 0
      %456 = vmatprep.subr.bf16.mxu0 0
      %457 = vmatpush1.bf16.xpose.msra.mxu0 0
      %458 = vmatprep.subr.bf16.mxu0 0
      %459 = vmatpush1.bf16.xpose.msra.mxu0 %v442
      %460 = vmatprep.subr.bf16.mxu0 0
      %461 = vmatpush2.bf16.xpose.msra.mxu0 0
      %462 = vmatprep.subr.bf16.mxu0 0
      %463 = vmatpush2.bf16.xpose.msra.mxu0 0
      %464 = vmatprep.subr.bf16.mxu0 0
      %465 = vmatpush2.bf16.xpose.msra.mxu0 0
      %466 = vmatprep.subr.bf16.mxu0 0
      %467 = vmatpush2.bf16.xpose.msra.mxu0 0
      %468 = vmatprep.subr.bf16.mxu0 0
      %469 = vmatpush2.bf16.xpose.msra.mxu0 0
      %470 = vmatprep.subr.bf16.mxu0 0
      %471 = vmatpush2.bf16.xpose.msra.mxu0 0
      %472 = vmatprep.subr.bf16.mxu0 0
      %473 = vmatpush2.bf16.xpose.msra.mxu0 0
      %474 = vmatprep.subr.bf16.mxu0 0
      %475 = vmatpush2.bf16.xpose.msra.mxu0 0
      %476 = vmatprep.mubr.bf16.mxu0 0
      %477 = vmatmul.mubr.bf16.gmra.mxu0 %v439
      %v478 = vpop.f32.mrf.mxu0
      %v479 = vadd.f32 0.0, %v478
      %v480 = vpop.f32.mrf.mxu0
      %v481 = vpop.f32.mrf.mxu0
      %v482 = vpop.f32.mrf.mxu0
      %483 = vdwg.mxu0
      %v484 = vld [vmem:[#allocation2] sm:$0xf]
      %v485 = vsel %vm299, %v341, -inf
      %486 = vmax.xlane.f32.xlu0 %v485
      %v487 = vpop.xlane.xlu0 %486
      %v488 = vsel %vm299, %v387, -inf
      %489 = vmax.xlane.f32.xlu0 %v488
      %v490 = vpop.xlane.xlu0 %489
      %v491 = vsel %vm299, %v433, -inf
      %492 = vmax.xlane.f32.xlu0 %v491
      %v493 = vpop.xlane.xlu0 %492
      %v494 = vsel %vm299, %v479, -inf
      %495 = vmax.xlane.f32.xlu0 %v494
      %v496 = vpop.xlane.xlu0 %495
      %v501 = vlaneseq
      %v502 = vand.u32 %v501, 127
      %v503 = vlaneseq
      %v504 = vshrl.u32 %v503, 7
      %v505 = vsub.s32 %v502, %v504
      %v506 = vrot.slane %v487, %v505
      %v507 = vlaneseq
      %v508 = vshrl.u32 %v507, 7
      %v509 = vsub.s32 %v502, %v508
      %v510 = vrot.slane %v490, %v509
      %v511 = vlaneseq
      %v512 = vshrl.u32 %v511, 7
      %v513 = vsub.s32 %v502, %v512
      %v514 = vrot.slane %v493, %v513
      %v515 = vlaneseq
      %v516 = vshrl.u32 %v515, 7
      %v517 = vsub.s32 %v502, %v516
      %v518 = vrot.slane %v496, %v517
      %vm519 = vcmask 1041409
      %v520 = vsel %vm519, %v510, %v506
      %vm521 = vcmask 1042434
      %v522 = vsel %vm521, %v514, %v520
      %vm523 = vcmask 1043459
      %v524 = vsel %vm523, %v518, %v522
      %v526 = vmax.f32 %v484, %v524
      %v527 = vsub.f32 %v484, %v526
      %v528 = vmul.f32 %v527, 1.442695
      %v529 = vpow.pop %v528
      %v530 = vlaneseq
      %v531 = vshrl.u32 %v530, 7
      %v532 = vsub.s32 0, %v531
      %v533 = vrot.slane %v526, %v532
      %535 = vbcast.lane.b32.xlu0 %v533, 256
      %v536 = vpop.permute.xlu0 %535
      %v537 = vlaneseq
      %v538 = vshrl.u32 %v537, 7
      %v539 = vsub.s32 1, %v538
      %v540 = vrot.slane %v526, %v539
      %542 = vbcast.lane.b32.xlu0 %v540, 256
      %v543 = vpop.permute.xlu0 %542
      %v544 = vlaneseq
      %v545 = vshrl.u32 %v544, 7
      %v546 = vsub.s32 2, %v545
      %v547 = vrot.slane %v526, %v546
      %549 = vbcast.lane.b32.xlu0 %v547, 256
      %v550 = vpop.permute.xlu0 %549
      %v551 = vlaneseq
      %v552 = vshrl.u32 %v551, 7
      %v553 = vsub.s32 3, %v552
      %v554 = vrot.slane %v526, %v553
      %556 = vbcast.lane.b32.xlu0 %v554, 256
      %v557 = vpop.permute.xlu0 %556
      %v558 = vsub.f32 %v341, %v536
      %v559 = vsub.f32 %v387, %v543
      %v560 = vsub.f32 %v433, %v550
      %v561 = vsub.f32 %v479, %v557
      %v562 = vmul.f32 %v558, 1.442695
      %v563 = vpow.pop %v562
      %v564 = vmul.f32 %v559, 1.442695
      %v565 = vpow.pop %v564
      %v566 = vmul.f32 %v560, 1.442695
      %v567 = vpow.pop %v566
      %v568 = vmul.f32 %v561, 1.442695
      %v569 = vpow.pop %v568
      %v570 = vld [vmem:[#allocation3] sm:$0xf]
      %v571 = vmul.f32 %v529, %v570
      %v572 = vsel %vm299, %v563, 0.0
      %573 = vadd.xlane.f32.xlu0 %v572
      %v574 = vpop.xlane.xlu0 %573
      %v575 = vsel %vm299, %v565, 0.0
      %576 = vadd.xlane.f32.xlu0 %v575
      %v577 = vpop.xlane.xlu0 %576
      %v578 = vsel %vm299, %v567, 0.0
      %579 = vadd.xlane.f32.xlu0 %v578
      %v580 = vpop.xlane.xlu0 %579
      %v581 = vsel %vm299, %v569, 0.0
      %582 = vadd.xlane.f32.xlu0 %v581
      %v583 = vpop.xlane.xlu0 %582
      %v588 = vlaneseq
      %v589 = vshrl.u32 %v588, 7
      %v590 = vsub.s32 %v502, %v589
      %v591 = vrot.slane %v574, %v590
      %v592 = vlaneseq
      %v593 = vshrl.u32 %v592, 7
      %v594 = vsub.s32 %v502, %v593
      %v595 = vrot.slane %v577, %v594
      %v596 = vlaneseq
      %v597 = vshrl.u32 %v596, 7
      %v598 = vsub.s32 %v502, %v597
      %v599 = vrot.slane %v580, %v598
      %v600 = vlaneseq
      %v601 = vshrl.u32 %v600, 7
      %v602 = vsub.s32 %v502, %v601
      %v603 = vrot.slane %v583, %v602
      %v604 = vsel %vm519, %v595, %v591
      %v605 = vsel %vm521, %v599, %v604
      %v606 = vsel %vm523, %v603, %v605
      %v608 = vadd.f32 %v571, %v606
      %vm609 = vcmask 60416
      %610 = vst.msk [vmem:[#allocation3] sm:$0xf] %vm609, %v608
      %v611 = vpack.c.bf16 %v563, %v563
      %v612 = vpack.c.bf16 %v565, %v565
      %v613 = vpack.c.bf16 %v567, %v567
      %v614 = vpack.c.bf16 %v569, %v569
      %v615 = vld [vmem:[%s267] sm:$0xf]
      %v616 = vld [vmem:[%s267 + $0x4] sm:$0xf]
      %v617 = vld [vmem:[%s267 + $0x8] sm:$0xf]
      %v618 = vld [vmem:[%s267 + $0xc] sm:$0xf]
      %v620 = vsel %vm299, %v611, 0
      %vm622 = vcmask 1043456
      %v624 = vsel %vm622, %v615, 0
      %626 = vmatprep.subr.bf16.mxu0 0
      %627 = vmatpush1.bf16.msra.mxu0 0
      %628 = vmatprep.subr.bf16.mxu0 0
      %629 = vmatpush1.bf16.msra.mxu0 0
      %630 = vmatprep.subr.bf16.mxu0 0
      %631 = vmatpush1.bf16.msra.mxu0 0
      %632 = vmatprep.subr.bf16.mxu0 0
      %633 = vmatpush1.bf16.msra.mxu0 0
      %634 = vmatprep.subr.bf16.mxu0 0
      %635 = vmatpush1.bf16.msra.mxu0 0
      %636 = vmatprep.subr.bf16.mxu0 0
      %637 = vmatpush1.bf16.msra.mxu0 0
      %638 = vmatprep.subr.bf16.mxu0 0
      %639 = vmatpush1.bf16.msra.mxu0 0
      %640 = vmatprep.subr.bf16.mxu0 0
      %641 = vmatpush1.bf16.msra.mxu0 %v624
      %642 = vmatprep.subr.bf16.mxu0 0
      %643 = vmatpush2.bf16.msra.mxu0 0
      %644 = vmatprep.subr.bf16.mxu0 0
      %645 = vmatpush2.bf16.msra.mxu0 0
      %646 = vmatprep.subr.bf16.mxu0 0
      %647 = vmatpush2.bf16.msra.mxu0 0
      %648 = vmatprep.subr.bf16.mxu0 0
      %649 = vmatpush2.bf16.msra.mxu0 0
      %650 = vmatprep.subr.bf16.mxu0 0
      %651 = vmatpush2.bf16.msra.mxu0 0
      %652 = vmatprep.subr.bf16.mxu0 0
      %653 = vmatpush2.bf16.msra.mxu0 0
      %654 = vmatprep.subr.bf16.mxu0 0
      %655 = vmatpush2.bf16.msra.mxu0 0
      %656 = vmatprep.subr.bf16.mxu0 0
      %657 = vmatpush2.bf16.msra.mxu0 0
      %658 = vmatprep.mubr.bf16.mxu0 0
      %659 = vmatmul.mubr.bf16.gmra.mxu0 %v620
      %v660 = vpop.f32.mrf.mxu0
      %v661 = vadd.f32 0.0, %v660
      %v662 = vpop.f32.mrf.mxu0
      %v663 = vpop.f32.mrf.mxu0
      %v664 = vpop.f32.mrf.mxu0
      %665 = vdwg.mxu0
      %v667 = vsel %vm299, %v612, 0
      %v670 = vsel %vm622, %v616, 0
      %672 = vmatprep.subr.bf16.mxu0 0
      %673 = vmatpush1.bf16.msra.mxu0 0
      %674 = vmatprep.subr.bf16.mxu0 0
      %675 = vmatpush1.bf16.msra.mxu0 0
      %676 = vmatprep.subr.bf16.mxu0 0
      %677 = vmatpush1.bf16.msra.mxu0 0
      %678 = vmatprep.subr.bf16.mxu0 0
      %679 = vmatpush1.bf16.msra.mxu0 0
      %680 = vmatprep.subr.bf16.mxu0 0
      %681 = vmatpush1.bf16.msra.mxu0 0
      %682 = vmatprep.subr.bf16.mxu0 0
      %683 = vmatpush1.bf16.msra.mxu0 0
      %684 = vmatprep.subr.bf16.mxu0 0
      %685 = vmatpush1.bf16.msra.mxu0 0
      %686 = vmatprep.subr.bf16.mxu0 0
      %687 = vmatpush1.bf16.msra.mxu0 %v670
      %688 = vmatprep.subr.bf16.mxu0 0
      %689 = vmatpush2.bf16.msra.mxu0 0
      %690 = vmatprep.subr.bf16.mxu0 0
      %691 = vmatpush2.bf16.msra.mxu0 0
      %692 = vmatprep.subr.bf16.mxu0 0
      %693 = vmatpush2.bf16.msra.mxu0 0
      %694 = vmatprep.subr.bf16.mxu0 0
      %695 = vmatpush2.bf16.msra.mxu0 0
      %696 = vmatprep.subr.bf16.mxu0 0
      %697 = vmatpush2.bf16.msra.mxu0 0
      %698 = vmatprep.subr.bf16.mxu0 0
      %699 = vmatpush2.bf16.msra.mxu0 0
      %700 = vmatprep.subr.bf16.mxu0 0
      %701 = vmatpush2.bf16.msra.mxu0 0
      %702 = vmatprep.subr.bf16.mxu0 0
      %703 = vmatpush2.bf16.msra.mxu0 0
      %704 = vmatprep.mubr.bf16.mxu0 0
      %705 = vmatmul.mubr.bf16.gmra.mxu0 %v667
      %v706 = vpop.f32.mrf.mxu0
      %v707 = vadd.f32 0.0, %v706
      %v708 = vpop.f32.mrf.mxu0
      %v709 = vpop.f32.mrf.mxu0
      %v710 = vpop.f32.mrf.mxu0
      %711 = vdwg.mxu0
      %v713 = vsel %vm299, %v613, 0
      %v716 = vsel %vm622, %v617, 0
      %718 = vmatprep.subr.bf16.mxu0 0
      %719 = vmatpush1.bf16.msra.mxu0 0
      %720 = vmatprep.subr.bf16.mxu0 0
      %721 = vmatpush1.bf16.msra.mxu0 0
      %722 = vmatprep.subr.bf16.mxu0 0
      %723 = vmatpush1.bf16.msra.mxu0 0
      %724 = vmatprep.subr.bf16.mxu0 0
      %725 = vmatpush1.bf16.msra.mxu0 0
      %726 = vmatprep.subr.bf16.mxu0 0
      %727 = vmatpush1.bf16.msra.mxu0 0
      %728 = vmatprep.subr.bf16.mxu0 0
      %729 = vmatpush1.bf16.msra.mxu0 0
      %730 = vmatprep.subr.bf16.mxu0 0
      %731 = vmatpush1.bf16.msra.mxu0 0
      %732 = vmatprep.subr.bf16.mxu0 0
      %733 = vmatpush1.bf16.msra.mxu0 %v716
      %734 = vmatprep.subr.bf16.mxu0 0
      %735 = vmatpush2.bf16.msra.mxu0 0
      %736 = vmatprep.subr.bf16.mxu0 0
      %737 = vmatpush2.bf16.msra.mxu0 0
      %738 = vmatprep.subr.bf16.mxu0 0
      %739 = vmatpush2.bf16.msra.mxu0 0
      %740 = vmatprep.subr.bf16.mxu0 0
      %741 = vmatpush2.bf16.msra.mxu0 0
      %742 = vmatprep.subr.bf16.mxu0 0
      %743 = vmatpush2.bf16.msra.mxu0 0
      %744 = vmatprep.subr.bf16.mxu0 0
      %745 = vmatpush2.bf16.msra.mxu0 0
      %746 = vmatprep.subr.bf16.mxu0 0
      %747 = vmatpush2.bf16.msra.mxu0 0
      %748 = vmatprep.subr.bf16.mxu0 0
      %749 = vmatpush2.bf16.msra.mxu0 0
      %750 = vmatprep.mubr.bf16.mxu0 0
      %751 = vmatmul.mubr.bf16.gmra.mxu0 %v713
      %v752 = vpop.f32.mrf.mxu0
      %v753 = vadd.f32 0.0, %v752
      %v754 = vpop.f32.mrf.mxu0
      %v755 = vpop.f32.mrf.mxu0
      %v756 = vpop.f32.mrf.mxu0
      %757 = vdwg.mxu0
      %v759 = vsel %vm299, %v614, 0
      %v762 = vsel %vm622, %v618, 0
      %764 = vmatprep.subr.bf16.mxu0 0
      %765 = vmatpush1.bf16.msra.mxu0 0
      %766 = vmatprep.subr.bf16.mxu0 0
      %767 = vmatpush1.bf16.msra.mxu0 0
      %768 = vmatprep.subr.bf16.mxu0 0
      %769 = vmatpush1.bf16.msra.mxu0 0
      %770 = vmatprep.subr.bf16.mxu0 0
      %771 = vmatpush1.bf16.msra.mxu0 0
      %772 = vmatprep.subr.bf16.mxu0 0
      %773 = vmatpush1.bf16.msra.mxu0 0
      %774 = vmatprep.subr.bf16.mxu0 0
      %775 = vmatpush1.bf16.msra.mxu0 0
      %776 = vmatprep.subr.bf16.mxu0 0
      %777 = vmatpush1.bf16.msra.mxu0 0
      %778 = vmatprep.subr.bf16.mxu0 0
      %779 = vmatpush1.bf16.msra.mxu0 %v762
      %780 = vmatprep.subr.bf16.mxu0 0
      %781 = vmatpush2.bf16.msra.mxu0 0
      %782 = vmatprep.subr.bf16.mxu0 0
      %783 = vmatpush2.bf16.msra.mxu0 0
      %784 = vmatprep.subr.bf16.mxu0 0
      %785 = vmatpush2.bf16.msra.mxu0 0
      %786 = vmatprep.subr.bf16.mxu0 0
      %787 = vmatpush2.bf16.msra.mxu0 0
      %788 = vmatprep.subr.bf16.mxu0 0
      %789 = vmatpush2.bf16.msra.mxu0 0
      %790 = vmatprep.subr.bf16.mxu0 0
      %791 = vmatpush2.bf16.msra.mxu0 0
      %792 = vmatprep.subr.bf16.mxu0 0
      %793 = vmatpush2.bf16.msra.mxu0 0
      %794 = vmatprep.subr.bf16.mxu0 0
      %795 = vmatpush2.bf16.msra.mxu0 0
      %796 = vmatprep.mubr.bf16.mxu0 0
      %797 = vmatmul.mubr.bf16.gmra.mxu0 %v759
      %v798 = vpop.f32.mrf.mxu0
      %v799 = vadd.f32 0.0, %v798
      %v800 = vpop.f32.mrf.mxu0
      %v801 = vpop.f32.mrf.mxu0
      %v802 = vpop.f32.mrf.mxu0
      %803 = vdwg.mxu0
      %v804 = vlaneseq
      %v805 = vshrl.u32 %v804, 7
      %v806 = vsub.s32 0, %v805
      %v807 = vrot.slane %v529, %v806
      %809 = vbcast.lane.b32.xlu0 %v807, 256
      %v810 = vpop.permute.xlu0 %809
      %v811 = vlaneseq
      %v812 = vshrl.u32 %v811, 7
      %v813 = vsub.s32 1, %v812
      %v814 = vrot.slane %v529, %v813
      %816 = vbcast.lane.b32.xlu0 %v814, 256
      %v817 = vpop.permute.xlu0 %816
      %v818 = vlaneseq
      %v819 = vshrl.u32 %v818, 7
      %v820 = vsub.s32 2, %v819
      %v821 = vrot.slane %v529, %v820
      %823 = vbcast.lane.b32.xlu0 %v821, 256
      %v824 = vpop.permute.xlu0 %823
      %v825 = vlaneseq
      %v826 = vshrl.u32 %v825, 7
      %v827 = vsub.s32 3, %v826
      %v828 = vrot.slane %v529, %v827
      %830 = vbcast.lane.b32.xlu0 %v828, 256
      %v831 = vpop.permute.xlu0 %830
      %v832 = vld [vmem:[#allocation4] sm:$0xff]
      %v833 = vld [vmem:[#allocation4 + $0x8] sm:$0xff]
      %v834 = vld [vmem:[#allocation4 + $0x10] sm:$0xff]
      %v835 = vld [vmem:[#allocation4 + $0x18] sm:$0xff]
      %v836 = vmul.f32 %v810, %v832
      %v837 = vmul.f32 %v817, %v833
      %v838 = vmul.f32 %v824, %v834
      %v839 = vmul.f32 %v831, %v835
      %v840 = vadd.f32 %v836, %v661
      %v841 = vadd.f32 %v837, %v707
      %v842 = vadd.f32 %v838, %v753
      %v843 = vadd.f32 %v839, %v799
      %844 = vst.msk [vmem:[#allocation4] sm:$0xff] %vm299, %v840
      %845 = vst.msk [vmem:[#allocation4 + $0x8] sm:$0xff] %vm299, %v841
      %846 = vst.msk [vmem:[#allocation4 + $0x10] sm:$0xff] %vm299, %v842
      %847 = vst.msk [vmem:[#allocation4 + $0x18] sm:$0xff] %vm299, %v843
      %848 = vst.msk [vmem:[#allocation2] sm:$0xf] %vm609, %v526
      // Predicated region
      $region37: #{multi_head_attention.4} parent=31 // pred_check
        %p849 = pneg %p279
      $region38: #{multi_head_attention.4} parent=31 // pred_check_branch
        %851 = sbr.rel (%p849) target = $region40
      $region39: #{multi_head_attention.4} parent=31 // pred_region
        %v852 = vld [vmem:[#allocation3] sm:$0xf]
        %v853 = vrcp.pop %v852
        %v854 = vmul.f32 %v852, %v853
        %v855 = vsub.f32 2.0, %v854
        %v856 = vmul.f32 %v853, %v855
        %v857 = vld [vmem:[#allocation4] sm:$0xff]
        %v858 = vld [vmem:[#allocation4 + $0x8] sm:$0xff]
        %v859 = vld [vmem:[#allocation4 + $0x10] sm:$0xff]
        %v860 = vld [vmem:[#allocation4 + $0x18] sm:$0xff]
        %v861 = vlaneseq
        %v862 = vshrl.u32 %v861, 7
        %v863 = vsub.s32 0, %v862
        %v864 = vrot.slane %v856, %v863
        %866 = vbcast.lane.b32.xlu0 %v864, 256
        %v867 = vpop.permute.xlu0 %866
        %v868 = vlaneseq
        %v869 = vshrl.u32 %v868, 7
        %v870 = vsub.s32 1, %v869
        %v871 = vrot.slane %v856, %v870
        %873 = vbcast.lane.b32.xlu0 %v871, 256
        %v874 = vpop.permute.xlu0 %873
        %v875 = vlaneseq
        %v876 = vshrl.u32 %v875, 7
        %v877 = vsub.s32 2, %v876
        %v878 = vrot.slane %v856, %v877
        %880 = vbcast.lane.b32.xlu0 %v878, 256
        %v881 = vpop.permute.xlu0 %880
        %v882 = vlaneseq
        %v883 = vshrl.u32 %v882, 7
        %v884 = vsub.s32 3, %v883
        %v885 = vrot.slane %v856, %v884
        %887 = vbcast.lane.b32.xlu0 %v885, 256
        %v888 = vpop.permute.xlu0 %887
        %v889 = vmul.f32 %v857, %v867
        %v890 = vmul.f32 %v858, %v874
        %v891 = vmul.f32 %v859, %v881
        %v892 = vmul.f32 %v860, %v888
        %v893 = vpack.c.bf16 %v889, %v889
        %v894 = vpack.c.bf16 %v890, %v890
        %v895 = vpack.c.bf16 %v891, %v891
        %v896 = vpack.c.bf16 %v892, %v892
        %897 = vst.msk [vmem:[%s276] sm:$0xf] %vm609, %v893
        %898 = vst.msk [vmem:[%s276 + $0x4] sm:$0xf] %vm609, %v894
        %899 = vst.msk [vmem:[%s276 + $0x8] sm:$0xf] %vm609, %v895
        %900 = vst.msk [vmem:[%s276 + $0xc] sm:$0xf] %vm609, %v896
      $region40: #{multi_head_attention.4} parent=31 // pred_fallthru
        _
      %s901 = smul.u32 4, %s19
      %p902 = scmp.lt.s32.totalorder %s901, 7
      %s903 = scalar_select %p902, %s901, 7
      %p904 = scmp.lt.s32.totalorder %s20, 0
      %s905 = scalar_select %p904, %s20, 0
      %s906 = sadd.s32 %s905, %s903
      %s907 = smul.addr %s906, 4
      %s908 = scalar_lea.vmem %s3, %s907
      // Predicated region
      $region41: #{multi_head_attention.4} parent=31 // pred_check
        %p909 = pneg %p137
      $region42: #{multi_head_attention.4} parent=31 // pred_check_branch
        %911 = sbr.rel (%p909) target = $region44
      $region43: #{multi_head_attention.4} parent=31 // pred_region
        %s912 = smul.u32 4, %s19
      $region44: #{multi_head_attention.4} parent=31 // pred_fallthru
        _
    $region32: #{multi_head_attention.4} parent=5 // pred_fallthru
      _
    %p913 = scmp.le.s32.totalorder 2, %s9
    // Predicated region
    $region45: #{multi_head_attention.4} parent=5 // pred_check
      %p914 = pneg %p913
    $region46: #{multi_head_attention.4} parent=5 // pred_check_branch
      %916 = sbr.rel (%p914) target = $region48
    $region47: #{multi_head_attention.4} parent=5 // pred_region
      %s917 = ssub.s32 %s9, 2
      // Predicated region
      $region49: #{multi_head_attention.4} parent=47 // pred_check
        %p918 = pneg %p143
      $region50: #{multi_head_attention.4} parent=47 // pred_check_branch
        %920 = sbr.rel (%p918) target = $region52
      $region51: #{multi_head_attention.4} parent=47 // pred_region
        %s921 = smul.u32 4, %s22
        %p922 = scmp.lt.s32.totalorder %s921, 7
        %s923 = scalar_select %p922, %s921, 7
        %p924 = scmp.lt.s32.totalorder %s23, 0
        %s925 = scalar_select %p924, %s23, 0
        %s926 = sadd.s32 %s925, %s923
        %s927 = smul.addr %s926, 4
        %s928 = scalar_lea.vmem %s3, %s927
      $region52: #{multi_head_attention.4} parent=47 // pred_fallthru
        _
    $region48: #{multi_head_attention.4} parent=5 // pred_fallthru
      _
  $region6: #{multi_head_attention.4} parent=0 // loop_footer
    %s13 = sadd.s32 1, %s9
  $region7: #{multi_head_attention.4} parent=0 // loop_footer_branch
    %8 = sbr.rel target = $region3
  $region8: #{multi_head_attention.4} parent=0 // loop_exit
    _

</llo_original>
